<compile_context>
chip_gen: v6e
topology: v6e:2x2x1
jax: 0.10.0
libtpu: 0.0.40
codegen_flags: <defaults>
</compile_context>

<pallas_src>
from functools import partial

import jax
import jax.numpy as jnp
from jax.experimental import pallas as pl
from jax.experimental.pallas import tpu as pltpu

PAD = 128          # lane-dense width used for every hidden/output layer
MAX_TILE_B = 2048  # cap on batch-tile rows (VMEM stays < ~1 MiB per tile)


# ---------------------------------------------------------------------------
# Chip-dependent knobs (evaluated at trace time, all Python-level).
# ---------------------------------------------------------------------------
def _device_kind():
    try:
        return jax.devices()[0].device_kind.lower()
    except Exception:
        return ""


def _num_tensorcores():
    """v7x has 2 TensorCores per chip; v5e/v6e (and unknown) have 1."""
    k = _device_kind()
    return 2 if ("v7" in k or "7x" in k) else 1


def _epilogue_dtype():
    """bf16 bias/ReLU epilogue on chips with a bf16 VPU (v6e/v7x); f32 else."""
    k = _device_kind()
    if "v6" in k or "v7" in k or "7x" in k:
        return jnp.bfloat16
    return jnp.float32


def _choose_tiling(batch, n_cores, max_tile=MAX_TILE_B):
    """Pick (b_pad, tile_b): one tile per TensorCore when the batch fits."""
    tile_b = min(max_tile, pl.cdiv(batch, n_cores))
    tile_b = pl.cdiv(tile_b, 16) * 16          # bf16 sublane-pack multiple
    b_pad = pl.cdiv(batch, tile_b) * tile_b
    return b_pad, tile_b


# ---------------------------------------------------------------------------
# Kernel
# ---------------------------------------------------------------------------
def dqn_mlp_kernel(x_ref, w1_ref, b1_ref, w_ref, b_ref, o_ref):
    """Fused 4-layer MLP on one batch tile.

    x_ref : [tile_b, n_in]   f32   raw (unpadded) observations
    w1_ref: [n_in, 128]      f32   layer-1 weight
    b1_ref: [1, 128]         f32   layer-1 bias
    w_ref : [3, 128, 128]    bf16  layer-2..4 weights, zero-padded
    b_ref : [3, 1, 128]      f32/bf16 layer-2..4 biases, zero-padded
    o_ref : [tile_b, 128]    bf16  Q-values in cols [:n_out], zeros elsewhere
    """
    _, n_in = x_ref.shape
    x = x_ref[...]                               # [tile_b, n_in] f32
    w1 = w1_ref[...]                             # [n_in, 128]    f32

    # Layer 1: Linear(n_in, 128) + ReLU.  K = n_in is tiny (4), so run it on
    # the VPU as n_in broadcast-FMAs in f32 instead of a padded MXU matmul.
    h = x[:, 0:1] * w1[0:1, :] + b1_ref[...]
    for k in range(1, n_in):
        h = h + x[:, k:k + 1] * w1[k:k + 1, :]
    h = jnp.maximum(h, 0.0).astype(jnp.bfloat16)

    # Layers 2 & 3: Linear + ReLU on the MXU (bf16 in, f32 accumulate),
    # epilogue (bias + ReLU) in b_ref.dtype (bf16 on v6e/v7x, f32 on v5e).
    for i in range(2):
        acc = jnp.dot(h, w_ref[i], preferred_element_type=jnp.float32)
        b = b_ref[i]                             # [1, 128]
        h = jnp.maximum(acc.astype(b.dtype) + b, 0.0).astype(jnp.bfloat16)

    # Layer 4: Linear(32, n_out), no activation.  Lane-dense bf16 store.
    acc = jnp.dot(h, w_ref[2], preferred_element_type=jnp.float32)
    b = b_ref[2]
    o_ref[...] = (acc.astype(b.dtype) + b).astype(o_ref.dtype)


# ---------------------------------------------------------------------------
# Jitted wrapper: pad batch -> kernel -> slice/cast, all fused under one jit.
# (In a real DQN training loop, fuse the Q-value consumer — argmax / TD loss —
#  into this same jit as well.)
# ---------------------------------------------------------------------------
@partial(jax.jit, static_argnames=("n_out",))
def dqn_cartpole_forward(x, w1, b1, w_slab, b_slab, n_out):
    """x: [B, n_in] f32. Returns [B, n_out] f32 Q-values."""
    B, n_in = x.shape
    n_cores = _num_tensorcores()
    b_pad, tile_b = _choose_tiling(B, n_cores)

    # Pad only the (cheap) batch axis; this fuses inside the jit.
    x_pad = x
    if b_pad != B:
        x_pad = jnp.zeros((b_pad, n_in), x.dtype).at[:B].set(x)

    out = pl.pallas_call(
        dqn_mlp_kernel,
        out_shape=jax.ShapeDtypeStruct((b_pad, PAD), jnp.bfloat16),
        grid_spec=pltpu.PrefetchScalarGridSpec(
            num_scalar_prefetch=0,
            grid=(b_pad // tile_b,),
            in_specs=[
                # x tile streams with the grid (raw n_in-wide rows, no pad).
                pl.BlockSpec((tile_b, n_in), lambda i: (i, 0)),
                # Parameters: constant block index -> VMEM-resident,
                # DMAed from HBM exactly once per call.
                pl.BlockSpec((n_in, PAD), lambda i: (0, 0)),
                pl.BlockSpec((1, PAD), lambda i: (0, 0)),
                pl.BlockSpec((3, PAD, PAD), lambda i: (0, 0, 0)),
                pl.BlockSpec((3, 1, PAD), lambda i: (0, 0, 0)),
            ],
            out_specs=pl.BlockSpec((tile_b, PAD), lambda i: (i, 0)),
        ),
        compiler_params=pltpu.CompilerParams(
            dimension_semantics=("parallel",)),
    )(x_pad, w1, b1, w_slab, b_slab)

    # Slice out real rows/actions and hand back f32 (fuses with the kernel).
    return out[:B, :n_out].astype(jnp.float32)


# ---------------------------------------------------------------------------
# Parameter init / packing / reference
# ---------------------------------------------------------------------------
def init_params(key, n_in, n_out):
    """PyTorch-Linear-like uniform fan-in init. Weights stored transposed as
    [in_features, out_features]; biases as [1, out_features]. f32."""
    dims = [n_in, 128, 64, 32, n_out]
    params = {}
    for i in range(4):
        fan_in, fan_out = dims[i], dims[i + 1]
        key, kw, kb = jax.random.split(key, 3)
        bound = 1.0 / (fan_in ** 0.5)
        params[f"w{i+1}"] = jax.random.uniform(
            kw, (fan_in, fan_out), jnp.float32, -bound, bound)
        params[f"b{i+1}"] = jax.random.uniform(
            kb, (1, fan_out), jnp.float32, -bound, bound)
    return params


def pack_params(params, n_in, n_out, epilogue_dtype):
    """Layer 1 stays f32 (VPU path). Layers 2-4 are packed into one
    zero-padded bf16 weight slab [3,128,128] and one bias slab [3,1,128]
    in the chip-appropriate epilogue dtype."""
    dims = [n_in, 128, 64, 32, n_out]
    w1 = params["w1"].astype(jnp.float32)                  # [n_in, 128]
    b1 = params["b1"].astype(jnp.float32)                  # [1, 128]
    w_slab = jnp.zeros((3, PAD, PAD), jnp.float32)
    b_slab = jnp.zeros((3, 1, PAD), jnp.float32)
    for i in range(3):                                     # layers 2..4
        fan_in, fan_out = dims[i + 1], dims[i + 2]
        w_slab = w_slab.at[i, :fan_in, :fan_out].set(params[f"w{i+2}"])
        b_slab = b_slab.at[i, 0, :fan_out].set(params[f"b{i+2}"][0])
    return w1, b1, w_slab.astype(jnp.bfloat16), b_slab.astype(epilogue_dtype)


def reference_forward(x, params):
    """Pure-JAX f32 reference matching the PyTorch module."""
    h = x
    for i in range(1, 4):
        h = jnp.maximum(h @ params[f"w{i}"] + params[f"b{i}"], 0.0)
    return h @ params["w4"] + params["b4"]


if __name__ == "__main__":
    key = jax.random.PRNGKey(0)
    n_in, n_out = 4, 2      # CartPole: 4 observations, 2 actions
    B = 256                  # a typical DQN replay minibatch

    key, kx = jax.random.split(key)
    x = jax.random.normal(kx, (B, n_in), jnp.float32)
    params = init_params(key, n_in, n_out)
    w1, b1, w_slab, b_slab = pack_params(params, n_in, n_out, _epilogue_dtype())

    out = dqn_cartpole_forward(x, w1, b1, w_slab, b_slab, n_out)
    out = jax.block_until_ready(out)

    ref = reference_forward(x, params)
    assert out.shape == (B, n_out)
    # bf16 weights/activations/output with f32 accumulation -> ~1e-2 level.
    assert jnp.allclose(out, ref, atol=5e-2, rtol=5e-2), (
        float(jnp.max(jnp.abs(out - ref))))

    print("KERNEL_OK")
</pallas_src>

<mosaic_0001>
module attributes {stable_mosaic.version = 11 : i64} {
  func.func @dqn_mlp_kernel(%arg0: i32, %arg1: memref<256x4xf32, #tpu.memory_space<vmem>>, %arg2: memref<4x128xf32, #tpu.memory_space<vmem>>, %arg3: memref<1x128xf32, #tpu.memory_space<vmem>>, %arg4: memref<3x128x128xbf16, #tpu.memory_space<vmem>>, %arg5: memref<3x1x128xf32, #tpu.memory_space<vmem>>, %arg6: memref<256x128xbf16, #tpu.memory_space<vmem>>) attributes {dimension_semantics = [#tpu.dimension_semantics<parallel>], iteration_bounds = array<i64: 1>, scalar_prefetch = 0 : i64, scratch_operands = 0 : i64, tpu.core_type = #tpu.core_type<tc>, window_params = [{transform_indices = @transform_0, window_bounds = array<i64: 256, 4>}, {pipeline_mode = #tpu.pipeline_mode<synchronous>, transform_indices = @transform_1, window_bounds = array<i64: 4, 128>}, {pipeline_mode = #tpu.pipeline_mode<synchronous>, transform_indices = @transform_2, window_bounds = array<i64: 1, 128>}, {pipeline_mode = #tpu.pipeline_mode<synchronous>, transform_indices = @transform_3, window_bounds = array<i64: 3, 128, 128>}, {pipeline_mode = #tpu.pipeline_mode<synchronous>, transform_indices = @transform_4, window_bounds = array<i64: 3, 1, 128>}, {transform_indices = @transform_5, window_bounds = array<i64: 256, 128>}]} {
    %c0 = arith.constant 0 : index
    %c0_0 = arith.constant 0 : index
    %0 = vector.load %arg1[%c0, %c0_0] : memref<256x4xf32, #tpu.memory_space<vmem>>, vector<256x4xf32>
    %c0_1 = arith.constant 0 : index
    %c0_2 = arith.constant 0 : index
    %1 = vector.load %arg2[%c0_1, %c0_2] : memref<4x128xf32, #tpu.memory_space<vmem>>, vector<4x128xf32>
    %2 = vector.extract_strided_slice %0 {offsets = [0, 0], sizes = [256, 1], strides = [1, 1]} : vector<256x4xf32> to vector<256x1xf32>
    %3 = vector.extract_strided_slice %1 {offsets = [0, 0], sizes = [1, 128], strides = [1, 1]} : vector<4x128xf32> to vector<1x128xf32>
    %4 = vector.broadcast %2 : vector<256x1xf32> to vector<256x128xf32>
    %5 = vector.broadcast %3 : vector<1x128xf32> to vector<256x128xf32>
    %6 = arith.mulf %4, %5 : vector<256x128xf32>
    %c0_3 = arith.constant 0 : index
    %c0_4 = arith.constant 0 : index
    %7 = vector.load %arg3[%c0_3, %c0_4] : memref<1x128xf32, #tpu.memory_space<vmem>>, vector<1x128xf32>
    %8 = vector.broadcast %7 : vector<1x128xf32> to vector<256x128xf32>
    %9 = arith.addf %6, %8 : vector<256x128xf32>
    %10 = vector.extract_strided_slice %0 {offsets = [0, 1], sizes = [256, 1], strides = [1, 1]} : vector<256x4xf32> to vector<256x1xf32>
    %11 = vector.extract_strided_slice %1 {offsets = [1, 0], sizes = [1, 128], strides = [1, 1]} : vector<4x128xf32> to vector<1x128xf32>
    %12 = vector.broadcast %10 : vector<256x1xf32> to vector<256x128xf32>
    %13 = vector.broadcast %11 : vector<1x128xf32> to vector<256x128xf32>
    %14 = arith.mulf %12, %13 : vector<256x128xf32>
    %15 = arith.addf %9, %14 : vector<256x128xf32>
    %16 = vector.extract_strided_slice %0 {offsets = [0, 2], sizes = [256, 1], strides = [1, 1]} : vector<256x4xf32> to vector<256x1xf32>
    %17 = vector.extract_strided_slice %1 {offsets = [2, 0], sizes = [1, 128], strides = [1, 1]} : vector<4x128xf32> to vector<1x128xf32>
    %18 = vector.broadcast %16 : vector<256x1xf32> to vector<256x128xf32>
    %19 = vector.broadcast %17 : vector<1x128xf32> to vector<256x128xf32>
    %20 = arith.mulf %18, %19 : vector<256x128xf32>
    %21 = arith.addf %15, %20 : vector<256x128xf32>
    %22 = vector.extract_strided_slice %0 {offsets = [0, 3], sizes = [256, 1], strides = [1, 1]} : vector<256x4xf32> to vector<256x1xf32>
    %23 = vector.extract_strided_slice %1 {offsets = [3, 0], sizes = [1, 128], strides = [1, 1]} : vector<4x128xf32> to vector<1x128xf32>
    %24 = vector.broadcast %22 : vector<256x1xf32> to vector<256x128xf32>
    %25 = vector.broadcast %23 : vector<1x128xf32> to vector<256x128xf32>
    %26 = arith.mulf %24, %25 : vector<256x128xf32>
    %27 = arith.addf %21, %26 : vector<256x128xf32>
    %cst = arith.constant 0.000000e+00 : f32
    %28 = vector.broadcast %cst : f32 to vector<256x128xf32>
    %29 = arith.maximumf %27, %28 : vector<256x128xf32>
    %30 = arith.truncf %29 : vector<256x128xf32> to vector<256x128xbf16>
    %c0_5 = arith.constant 0 : index
    %c0_6 = arith.constant 0 : index
    %c0_7 = arith.constant 0 : index
    %31 = vector.load %arg4[%c0_5, %c0_6, %c0_7] : memref<3x128x128xbf16, #tpu.memory_space<vmem>>, vector<1x128x128xbf16>
    %32 = vector.shape_cast %31 : vector<1x128x128xbf16> to vector<128x128xbf16>
    %cst_8 = arith.constant dense<0.000000e+00> : vector<256x128xf32>
    %33 = tpu.matmul %30, %32, %cst_8 {dimension_numbers = #tpu.dot_dimension_numbers<[1], [0], [0], [1], [0, 0, 1, 1], [], []>} : vector<256x128xbf16>, vector<128x128xbf16>, vector<256x128xf32> -> vector<256x128xf32>
    %c0_9 = arith.constant 0 : index
    %c0_10 = arith.constant 0 : index
    %c0_11 = arith.constant 0 : index
    %34 = vector.load %arg5[%c0_9, %c0_10, %c0_11] : memref<3x1x128xf32, #tpu.memory_space<vmem>>, vector<1x1x128xf32>
    %35 = vector.shape_cast %34 : vector<1x1x128xf32> to vector<1x128xf32>
    %36 = vector.broadcast %35 : vector<1x128xf32> to vector<256x128xf32>
    %37 = arith.addf %33, %36 : vector<256x128xf32>
    %cst_12 = arith.constant 0.000000e+00 : f32
    %38 = vector.broadcast %cst_12 : f32 to vector<256x128xf32>
    %39 = arith.maximumf %37, %38 : vector<256x128xf32>
    %40 = arith.truncf %39 : vector<256x128xf32> to vector<256x128xbf16>
    %c1 = arith.constant 1 : index
    %c0_13 = arith.constant 0 : index
    %c0_14 = arith.constant 0 : index
    %41 = vector.load %arg4[%c1, %c0_13, %c0_14] : memref<3x128x128xbf16, #tpu.memory_space<vmem>>, vector<1x128x128xbf16>
    %42 = vector.shape_cast %41 : vector<1x128x128xbf16> to vector<128x128xbf16>
    %cst_15 = arith.constant dense<0.000000e+00> : vector<256x128xf32>
    %43 = tpu.matmul %40, %42, %cst_15 {dimension_numbers = #tpu.dot_dimension_numbers<[1], [0], [0], [1], [0, 0, 1, 1], [], []>} : vector<256x128xbf16>, vector<128x128xbf16>, vector<256x128xf32> -> vector<256x128xf32>
    %c1_16 = arith.constant 1 : index
    %c0_17 = arith.constant 0 : index
    %c0_18 = arith.constant 0 : index
    %44 = vector.load %arg5[%c1_16, %c0_17, %c0_18] : memref<3x1x128xf32, #tpu.memory_space<vmem>>, vector<1x1x128xf32>
    %45 = vector.shape_cast %44 : vector<1x1x128xf32> to vector<1x128xf32>
    %46 = vector.broadcast %45 : vector<1x128xf32> to vector<256x128xf32>
    %47 = arith.addf %43, %46 : vector<256x128xf32>
    %cst_19 = arith.constant 0.000000e+00 : f32
    %48 = vector.broadcast %cst_19 : f32 to vector<256x128xf32>
    %49 = arith.maximumf %47, %48 : vector<256x128xf32>
    %50 = arith.truncf %49 : vector<256x128xf32> to vector<256x128xbf16>
    %c2 = arith.constant 2 : index
    %c0_20 = arith.constant 0 : index
    %c0_21 = arith.constant 0 : index
    %51 = vector.load %arg4[%c2, %c0_20, %c0_21] : memref<3x128x128xbf16, #tpu.memory_space<vmem>>, vector<1x128x128xbf16>
    %52 = vector.shape_cast %51 : vector<1x128x128xbf16> to vector<128x128xbf16>
    %cst_22 = arith.constant dense<0.000000e+00> : vector<256x128xf32>
    %53 = tpu.matmul %50, %52, %cst_22 {dimension_numbers = #tpu.dot_dimension_numbers<[1], [0], [0], [1], [0, 0, 1, 1], [], []>} : vector<256x128xbf16>, vector<128x128xbf16>, vector<256x128xf32> -> vector<256x128xf32>
    %c2_23 = arith.constant 2 : index
    %c0_24 = arith.constant 0 : index
    %c0_25 = arith.constant 0 : index
    %54 = vector.load %arg5[%c2_23, %c0_24, %c0_25] : memref<3x1x128xf32, #tpu.memory_space<vmem>>, vector<1x1x128xf32>
    %55 = vector.shape_cast %54 : vector<1x1x128xf32> to vector<1x128xf32>
    %56 = vector.broadcast %55 : vector<1x128xf32> to vector<256x128xf32>
    %57 = arith.addf %53, %56 : vector<256x128xf32>
    %58 = arith.truncf %57 : vector<256x128xf32> to vector<256x128xbf16>
    %c0_26 = arith.constant 0 : index
    %c0_27 = arith.constant 0 : index
    %59 = vector.load %arg6[%c0_26, %c0_27] : memref<256x128xbf16, #tpu.memory_space<vmem>>, vector<256x128xbf16>
    tpu.vector_store %arg6[%c0_26, %c0_27], %58 {strides = array<i32>} : memref<256x128xbf16, #tpu.memory_space<vmem>>, vector<256x128xbf16>,
    return
  }
  func.func @transform_0(%arg0: i32) -> (i32, i32) {
    %c0_i32 = arith.constant 0 : i32
    %c0_i32_0 = arith.constant 0 : i32
    return %arg0, %c0_i32 : i32, i32
  }
  func.func @transform_1(%arg0: i32) -> (i32, i32) {
    %c0_i32 = arith.constant 0 : i32
    %c0_i32_0 = arith.constant 0 : i32
    %c0_i32_1 = arith.constant 0 : i32
    return %c0_i32, %c0_i32_0 : i32, i32
  }
  func.func @transform_2(%arg0: i32) -> (i32, i32) {
    %c0_i32 = arith.constant 0 : i32
    %c0_i32_0 = arith.constant 0 : i32
    %c0_i32_1 = arith.constant 0 : i32
    return %c0_i32, %c0_i32_0 : i32, i32
  }
  func.func @transform_3(%arg0: i32) -> (i32, i32, i32) {
    %c0_i32 = arith.constant 0 : i32
    %c0_i32_0 = arith.constant 0 : i32
    %c0_i32_1 = arith.constant 0 : i32
    %c0_i32_2 = arith.constant 0 : i32
    return %c0_i32, %c0_i32_0, %c0_i32_1 : i32, i32, i32
  }
  func.func @transform_4(%arg0: i32) -> (i32, i32, i32) {
    %c0_i32 = arith.constant 0 : i32
    %c0_i32_0 = arith.constant 0 : i32
    %c0_i32_1 = arith.constant 0 : i32
    %c0_i32_2 = arith.constant 0 : i32
    return %c0_i32, %c0_i32_0, %c0_i32_1 : i32, i32, i32
  }
  func.func @transform_5(%arg0: i32) -> (i32, i32) {
    %c0_i32 = arith.constant 0 : i32
    %c0_i32_0 = arith.constant 0 : i32
    return %arg0, %c0_i32 : i32, i32
  }
}

</mosaic_0001>

<llo_original>
// kernel: dqn_cartpole_forward.1
$region0: #{dqn_cartpole_forward.1}
  #allocation0 [shape = 'u32[]', space=smem, size = 0x4, offset = 0x4, fixed_abs, tag = 'smem constant byte address 0x4 - core index']
  #allocation1 [shape = 'u32[144,128]{1,0:T(1,128)}', space=vmem, size = 0x12000, scoped, tag = 'internal scratch']
  %s0 = inlined_call_operand.vmem [shape: f32[256,4], index: 0, kind: input, shape index: {}]
  %s1 = inlined_call_operand.vmem [shape: f32[4,128], index: 1, kind: input, shape index: {}]
  %s2 = inlined_call_operand.vmem [shape: f32[1,128], index: 2, kind: input, shape index: {}]
  %s3 = inlined_call_operand.vmem [shape: bf16[3,128,128], index: 3, kind: input, shape index: {}]
  %s4 = inlined_call_operand.vmem [shape: f32[3,1,128], index: 4, kind: input, shape index: {}]
  %s5 = inlined_call_operand.vmem [shape: bf16[256,128], index: 5, kind: output, shape index: {}]
  %s6 = sld [smem:[#allocation0]]
  $region30: #{dqn_cartpole_forward.1} parent=0
    _
  %s8 = ssub.s32 1, %s6
  %s9 = scalar_select 0, %s8, %s6
  // Predicated region
  $region2: #{dqn_cartpole_forward.1} parent=0 // pred_check
    _
  $region3: #{dqn_cartpole_forward.1} parent=0 // pred_check_branch
    %11 = sbr.rel (0) target = $region5
  $region4: #{dqn_cartpole_forward.1} parent=0 // pred_region
    _
  $region5: #{dqn_cartpole_forward.1} parent=0 // pred_fallthru
    _
  // Predicated region
  $region6: #{dqn_cartpole_forward.1} parent=0 // pred_check
    _
  $region7: #{dqn_cartpole_forward.1} parent=0 // pred_check_branch
    %13 = sbr.rel (0) target = $region9
  $region8: #{dqn_cartpole_forward.1} parent=0 // pred_region
    _
  $region9: #{dqn_cartpole_forward.1} parent=0 // pred_fallthru
    _
  // Predicated region
  $region10: #{dqn_cartpole_forward.1} parent=0 // pred_check
    _
  $region11: #{dqn_cartpole_forward.1} parent=0 // pred_check_branch
    %15 = sbr.rel (0) target = $region13
  $region12: #{dqn_cartpole_forward.1} parent=0 // pred_region
    _
  $region13: #{dqn_cartpole_forward.1} parent=0 // pred_fallthru
    _
  // Predicated region
  $region14: #{dqn_cartpole_forward.1} parent=0 // pred_check
    _
  $region15: #{dqn_cartpole_forward.1} parent=0 // pred_check_branch
    %17 = sbr.rel (0) target = $region17
  $region16: #{dqn_cartpole_forward.1} parent=0 // pred_region
    _
  $region17: #{dqn_cartpole_forward.1} parent=0 // pred_fallthru
    _
  // Predicated region
  $region18: #{dqn_cartpole_forward.1} parent=0 // pred_check
    _
  $region19: #{dqn_cartpole_forward.1} parent=0 // pred_check_branch
    %19 = sbr.rel (0) target = $region21
  $region20: #{dqn_cartpole_forward.1} parent=0 // pred_region
    _
  $region21: #{dqn_cartpole_forward.1} parent=0 // pred_fallthru
    _
  %v21 = vld [vmem:[%s0] sm:$0xff]
  %v22 = vld [vmem:[%s0 + $0x8] sm:$0xff]
  %v23 = vld [vmem:[%s0 + $0x10] sm:$0xff]
  %v24 = vld [vmem:[%s0 + $0x18] sm:$0xff]
  %v25 = vld [vmem:[%s0 + $0x20] sm:$0xff]
  %v26 = vld [vmem:[%s0 + $0x28] sm:$0xff]
  %v27 = vld [vmem:[%s0 + $0x30] sm:$0xff]
  %v28 = vld [vmem:[%s0 + $0x38] sm:$0xff]
  %v29 = vld [vmem:[%s0 + $0x40] sm:$0xff]
  %v30 = vld [vmem:[%s0 + $0x48] sm:$0xff]
  %v31 = vld [vmem:[%s0 + $0x50] sm:$0xff]
  %v32 = vld [vmem:[%s0 + $0x58] sm:$0xff]
  %v33 = vld [vmem:[%s0 + $0x60] sm:$0xff]
  %v34 = vld [vmem:[%s0 + $0x68] sm:$0xff]
  %v35 = vld [vmem:[%s0 + $0x70] sm:$0xff]
  %v36 = vld [vmem:[%s0 + $0x78] sm:$0xff]
  %v37 = vld [vmem:[%s0 + $0x80] sm:$0xff]
  %v38 = vld [vmem:[%s0 + $0x88] sm:$0xff]
  %v39 = vld [vmem:[%s0 + $0x90] sm:$0xff]
  %v40 = vld [vmem:[%s0 + $0x98] sm:$0xff]
  %v41 = vld [vmem:[%s0 + $0xa0] sm:$0xff]
  %v42 = vld [vmem:[%s0 + $0xa8] sm:$0xff]
  %v43 = vld [vmem:[%s0 + $0xb0] sm:$0xff]
  %v44 = vld [vmem:[%s0 + $0xb8] sm:$0xff]
  %v45 = vld [vmem:[%s0 + $0xc0] sm:$0xff]
  %v46 = vld [vmem:[%s0 + $0xc8] sm:$0xff]
  %v47 = vld [vmem:[%s0 + $0xd0] sm:$0xff]
  %v48 = vld [vmem:[%s0 + $0xd8] sm:$0xff]
  %v49 = vld [vmem:[%s0 + $0xe0] sm:$0xff]
  %v50 = vld [vmem:[%s0 + $0xe8] sm:$0xff]
  %v51 = vld [vmem:[%s0 + $0xf0] sm:$0xff]
  %v52 = vld [vmem:[%s0 + $0xf8] sm:$0xff]
  %v53 = vld [vmem:[%s1] sm:$0xf]
  %55 = vset.pattern.permute.xlu0 0
  %56 = vperm.xlu0 %55, %v21
  %v57 = vpop.permute.xlu0 %56
  %60 = vset.pattern.permute.xlu0 0
  %61 = vperm.xlu0 %60, %v22
  %v62 = vpop.permute.xlu0 %61
  %65 = vset.pattern.permute.xlu0 0
  %66 = vperm.xlu0 %65, %v23
  %v67 = vpop.permute.xlu0 %66
  %70 = vset.pattern.permute.xlu0 0
  %71 = vperm.xlu0 %70, %v24
  %v72 = vpop.permute.xlu0 %71
  %75 = vset.pattern.permute.xlu0 0
  %76 = vperm.xlu0 %75, %v25
  %v77 = vpop.permute.xlu0 %76
  %80 = vset.pattern.permute.xlu0 0
  %81 = vperm.xlu0 %80, %v26
  %v82 = vpop.permute.xlu0 %81
  %85 = vset.pattern.permute.xlu0 0
  %86 = vperm.xlu0 %85, %v27
  %v87 = vpop.permute.xlu0 %86
  %90 = vset.pattern.permute.xlu0 0
  %91 = vperm.xlu0 %90, %v28
  %v92 = vpop.permute.xlu0 %91
  %95 = vset.pattern.permute.xlu0 0
  %96 = vperm.xlu0 %95, %v29
  %v97 = vpop.permute.xlu0 %96
  %100 = vset.pattern.permute.xlu0 0
  %101 = vperm.xlu0 %100, %v30
  %v102 = vpop.permute.xlu0 %101
  %105 = vset.pattern.permute.xlu0 0
  %106 = vperm.xlu0 %105, %v31
  %v107 = vpop.permute.xlu0 %106
  %110 = vset.pattern.permute.xlu0 0
  %111 = vperm.xlu0 %110, %v32
  %v112 = vpop.permute.xlu0 %111
  %115 = vset.pattern.permute.xlu0 0
  %116 = vperm.xlu0 %115, %v33
  %v117 = vpop.permute.xlu0 %116
  %120 = vset.pattern.permute.xlu0 0
  %121 = vperm.xlu0 %120, %v34
  %v122 = vpop.permute.xlu0 %121
  %125 = vset.pattern.permute.xlu0 0
  %126 = vperm.xlu0 %125, %v35
  %v127 = vpop.permute.xlu0 %126
  %130 = vset.pattern.permute.xlu0 0
  %131 = vperm.xlu0 %130, %v36
  %v132 = vpop.permute.xlu0 %131
  %135 = vset.pattern.permute.xlu0 0
  %136 = vperm.xlu0 %135, %v37
  %v137 = vpop.permute.xlu0 %136
  %140 = vset.pattern.permute.xlu0 0
  %141 = vperm.xlu0 %140, %v38
  %v142 = vpop.permute.xlu0 %141
  %145 = vset.pattern.permute.xlu0 0
  %146 = vperm.xlu0 %145, %v39
  %v147 = vpop.permute.xlu0 %146
  %150 = vset.pattern.permute.xlu0 0
  %151 = vperm.xlu0 %150, %v40
  %v152 = vpop.permute.xlu0 %151
  %155 = vset.pattern.permute.xlu0 0
  %156 = vperm.xlu0 %155, %v41
  %v157 = vpop.permute.xlu0 %156
  %160 = vset.pattern.permute.xlu0 0
  %161 = vperm.xlu0 %160, %v42
  %v162 = vpop.permute.xlu0 %161
  %165 = vset.pattern.permute.xlu0 0
  %166 = vperm.xlu0 %165, %v43
  %v167 = vpop.permute.xlu0 %166
  %170 = vset.pattern.permute.xlu0 0
  %171 = vperm.xlu0 %170, %v44
  %v172 = vpop.permute.xlu0 %171
  %175 = vset.pattern.permute.xlu0 0
  %176 = vperm.xlu0 %175, %v45
  %v177 = vpop.permute.xlu0 %176
  %180 = vset.pattern.permute.xlu0 0
  %181 = vperm.xlu0 %180, %v46
  %v182 = vpop.permute.xlu0 %181
  %185 = vset.pattern.permute.xlu0 0
  %186 = vperm.xlu0 %185, %v47
  %v187 = vpop.permute.xlu0 %186
  %190 = vset.pattern.permute.xlu0 0
  %191 = vperm.xlu0 %190, %v48
  %v192 = vpop.permute.xlu0 %191
  %195 = vset.pattern.permute.xlu0 0
  %196 = vperm.xlu0 %195, %v49
  %v197 = vpop.permute.xlu0 %196
  %200 = vset.pattern.permute.xlu0 0
  %201 = vperm.xlu0 %200, %v50
  %v202 = vpop.permute.xlu0 %201
  %205 = vset.pattern.permute.xlu0 0
  %206 = vperm.xlu0 %205, %v51
  %v207 = vpop.permute.xlu0 %206
  %210 = vset.pattern.permute.xlu0 0
  %211 = vperm.xlu0 %210, %v52
  %v212 = vpop.permute.xlu0 %211
  %v214 = vlaneseq
  %v215 = vshrl.u32 %v214, 7
  %v216 = vsub.s32 0, %v215
  %v217 = vrot.slane %v53, %v216
  %v218 = vmul.f32 %v57, %v217
  %v219 = vmul.f32 %v62, %v217
  %v220 = vmul.f32 %v67, %v217
  %v221 = vmul.f32 %v72, %v217
  %v222 = vmul.f32 %v77, %v217
  %v223 = vmul.f32 %v82, %v217
  %v224 = vmul.f32 %v87, %v217
  %v225 = vmul.f32 %v92, %v217
  %v226 = vmul.f32 %v97, %v217
  %v227 = vmul.f32 %v102, %v217
  %v228 = vmul.f32 %v107, %v217
  %v229 = vmul.f32 %v112, %v217
  %v230 = vmul.f32 %v117, %v217
  %v231 = vmul.f32 %v122, %v217
  %v232 = vmul.f32 %v127, %v217
  %v233 = vmul.f32 %v132, %v217
  %v234 = vmul.f32 %v137, %v217
  %v235 = vmul.f32 %v142, %v217
  %v236 = vmul.f32 %v147, %v217
  %v237 = vmul.f32 %v152, %v217
  %v238 = vmul.f32 %v157, %v217
  %v239 = vmul.f32 %v162, %v217
  %v240 = vmul.f32 %v167, %v217
  %v241 = vmul.f32 %v172, %v217
  %v242 = vmul.f32 %v177, %v217
  %v243 = vmul.f32 %v182, %v217
  %v244 = vmul.f32 %v187, %v217
  %v245 = vmul.f32 %v192, %v217
  %v246 = vmul.f32 %v197, %v217
  %v247 = vmul.f32 %v202, %v217
  %v248 = vmul.f32 %v207, %v217
  %v249 = vmul.f32 %v212, %v217
  %v250 = vld [vmem:[%s2] sm:$0x1]
  %v252 = vlaneseq
  %v253 = vshrl.u32 %v252, 7
  %v254 = vsub.s32 0, %v253
  %v255 = vrot.slane %v250, %v254
  %v257 = vadd.f32 %v218, %v255
  %v258 = vadd.f32 %v219, %v255
  %v259 = vadd.f32 %v220, %v255
  %v260 = vadd.f32 %v221, %v255
  %v261 = vadd.f32 %v222, %v255
  %v262 = vadd.f32 %v223, %v255
  %v263 = vadd.f32 %v224, %v255
  %v264 = vadd.f32 %v225, %v255
  %v265 = vadd.f32 %v226, %v255
  %v266 = vadd.f32 %v227, %v255
  %v267 = vadd.f32 %v228, %v255
  %v268 = vadd.f32 %v229, %v255
  %v269 = vadd.f32 %v230, %v255
  %v270 = vadd.f32 %v231, %v255
  %v271 = vadd.f32 %v232, %v255
  %v272 = vadd.f32 %v233, %v255
  %v273 = vadd.f32 %v234, %v255
  %v274 = vadd.f32 %v235, %v255
  %v275 = vadd.f32 %v236, %v255
  %v276 = vadd.f32 %v237, %v255
  %v277 = vadd.f32 %v238, %v255
  %v278 = vadd.f32 %v239, %v255
  %v279 = vadd.f32 %v240, %v255
  %v280 = vadd.f32 %v241, %v255
  %v281 = vadd.f32 %v242, %v255
  %v282 = vadd.f32 %v243, %v255
  %v283 = vadd.f32 %v244, %v255
  %v284 = vadd.f32 %v245, %v255
  %v285 = vadd.f32 %v246, %v255
  %v286 = vadd.f32 %v247, %v255
  %v287 = vadd.f32 %v248, %v255
  %v288 = vadd.f32 %v249, %v255
  %289 = vset.pattern.permute.xlu0 1
  %290 = vperm.xlu0 %289, %v21
  %v291 = vpop.permute.xlu0 %290
  %293 = vset.pattern.permute.xlu0 1
  %294 = vperm.xlu0 %293, %v22
  %v295 = vpop.permute.xlu0 %294
  %297 = vset.pattern.permute.xlu0 1
  %298 = vperm.xlu0 %297, %v23
  %v299 = vpop.permute.xlu0 %298
  %301 = vset.pattern.permute.xlu0 1
  %302 = vperm.xlu0 %301, %v24
  %v303 = vpop.permute.xlu0 %302
  %305 = vset.pattern.permute.xlu0 1
  %306 = vperm.xlu0 %305, %v25
  %v307 = vpop.permute.xlu0 %306
  %309 = vset.pattern.permute.xlu0 1
  %310 = vperm.xlu0 %309, %v26
  %v311 = vpop.permute.xlu0 %310
  %313 = vset.pattern.permute.xlu0 1
  %314 = vperm.xlu0 %313, %v27
  %v315 = vpop.permute.xlu0 %314
  %317 = vset.pattern.permute.xlu0 1
  %318 = vperm.xlu0 %317, %v28
  %v319 = vpop.permute.xlu0 %318
  %321 = vset.pattern.permute.xlu0 1
  %322 = vperm.xlu0 %321, %v29
  %v323 = vpop.permute.xlu0 %322
  %325 = vset.pattern.permute.xlu0 1
  %326 = vperm.xlu0 %325, %v30
  %v327 = vpop.permute.xlu0 %326
  %329 = vset.pattern.permute.xlu0 1
  %330 = vperm.xlu0 %329, %v31
  %v331 = vpop.permute.xlu0 %330
  %333 = vset.pattern.permute.xlu0 1
  %334 = vperm.xlu0 %333, %v32
  %v335 = vpop.permute.xlu0 %334
  %337 = vset.pattern.permute.xlu0 1
  %338 = vperm.xlu0 %337, %v33
  %v339 = vpop.permute.xlu0 %338
  %341 = vset.pattern.permute.xlu0 1
  %342 = vperm.xlu0 %341, %v34
  %v343 = vpop.permute.xlu0 %342
  %345 = vset.pattern.permute.xlu0 1
  %346 = vperm.xlu0 %345, %v35
  %v347 = vpop.permute.xlu0 %346
  %349 = vset.pattern.permute.xlu0 1
  %350 = vperm.xlu0 %349, %v36
  %v351 = vpop.permute.xlu0 %350
  %353 = vset.pattern.permute.xlu0 1
  %354 = vperm.xlu0 %353, %v37
  %v355 = vpop.permute.xlu0 %354
  %357 = vset.pattern.permute.xlu0 1
  %358 = vperm.xlu0 %357, %v38
  %v359 = vpop.permute.xlu0 %358
  %361 = vset.pattern.permute.xlu0 1
  %362 = vperm.xlu0 %361, %v39
  %v363 = vpop.permute.xlu0 %362
  %365 = vset.pattern.permute.xlu0 1
  %366 = vperm.xlu0 %365, %v40
  %v367 = vpop.permute.xlu0 %366
  %369 = vset.pattern.permute.xlu0 1
  %370 = vperm.xlu0 %369, %v41
  %v371 = vpop.permute.xlu0 %370
  %373 = vset.pattern.permute.xlu0 1
  %374 = vperm.xlu0 %373, %v42
  %v375 = vpop.permute.xlu0 %374
  %377 = vset.pattern.permute.xlu0 1
  %378 = vperm.xlu0 %377, %v43
  %v379 = vpop.permute.xlu0 %378
  %381 = vset.pattern.permute.xlu0 1
  %382 = vperm.xlu0 %381, %v44
  %v383 = vpop.permute.xlu0 %382
  %385 = vset.pattern.permute.xlu0 1
  %386 = vperm.xlu0 %385, %v45
  %v387 = vpop.permute.xlu0 %386
  %389 = vset.pattern.permute.xlu0 1
  %390 = vperm.xlu0 %389, %v46
  %v391 = vpop.permute.xlu0 %390
  %393 = vset.pattern.permute.xlu0 1
  %394 = vperm.xlu0 %393, %v47
  %v395 = vpop.permute.xlu0 %394
  %397 = vset.pattern.permute.xlu0 1
  %398 = vperm.xlu0 %397, %v48
  %v399 = vpop.permute.xlu0 %398
  %401 = vset.pattern.permute.xlu0 1
  %402 = vperm.xlu0 %401, %v49
  %v403 = vpop.permute.xlu0 %402
  %405 = vset.pattern.permute.xlu0 1
  %406 = vperm.xlu0 %405, %v50
  %v407 = vpop.permute.xlu0 %406
  %409 = vset.pattern.permute.xlu0 1
  %410 = vperm.xlu0 %409, %v51
  %v411 = vpop.permute.xlu0 %410
  %413 = vset.pattern.permute.xlu0 1
  %414 = vperm.xlu0 %413, %v52
  %v415 = vpop.permute.xlu0 %414
  %v417 = vlaneseq
  %v418 = vshrl.u32 %v417, 7
  %v419 = vsub.s32 1, %v418
  %v420 = vrot.slane %v53, %v419
  %v421 = vmul.f32 %v291, %v420
  %v422 = vmul.f32 %v295, %v420
  %v423 = vmul.f32 %v299, %v420
  %v424 = vmul.f32 %v303, %v420
  %v425 = vmul.f32 %v307, %v420
  %v426 = vmul.f32 %v311, %v420
  %v427 = vmul.f32 %v315, %v420
  %v428 = vmul.f32 %v319, %v420
  %v429 = vmul.f32 %v323, %v420
  %v430 = vmul.f32 %v327, %v420
  %v431 = vmul.f32 %v331, %v420
  %v432 = vmul.f32 %v335, %v420
  %v433 = vmul.f32 %v339, %v420
  %v434 = vmul.f32 %v343, %v420
  %v435 = vmul.f32 %v347, %v420
  %v436 = vmul.f32 %v351, %v420
  %v437 = vmul.f32 %v355, %v420
  %v438 = vmul.f32 %v359, %v420
  %v439 = vmul.f32 %v363, %v420
  %v440 = vmul.f32 %v367, %v420
  %v441 = vmul.f32 %v371, %v420
  %v442 = vmul.f32 %v375, %v420
  %v443 = vmul.f32 %v379, %v420
  %v444 = vmul.f32 %v383, %v420
  %v445 = vmul.f32 %v387, %v420
  %v446 = vmul.f32 %v391, %v420
  %v447 = vmul.f32 %v395, %v420
  %v448 = vmul.f32 %v399, %v420
  %v449 = vmul.f32 %v403, %v420
  %v450 = vmul.f32 %v407, %v420
  %v451 = vmul.f32 %v411, %v420
  %v452 = vmul.f32 %v415, %v420
  %v453 = vadd.f32 %v257, %v421
  %v454 = vadd.f32 %v258, %v422
  %v455 = vadd.f32 %v259, %v423
  %v456 = vadd.f32 %v260, %v424
  %v457 = vadd.f32 %v261, %v425
  %v458 = vadd.f32 %v262, %v426
  %v459 = vadd.f32 %v263, %v427
  %v460 = vadd.f32 %v264, %v428
  %v461 = vadd.f32 %v265, %v429
  %v462 = vadd.f32 %v266, %v430
  %v463 = vadd.f32 %v267, %v431
  %v464 = vadd.f32 %v268, %v432
  %v465 = vadd.f32 %v269, %v433
  %v466 = vadd.f32 %v270, %v434
  %v467 = vadd.f32 %v271, %v435
  %v468 = vadd.f32 %v272, %v436
  %v469 = vadd.f32 %v273, %v437
  %v470 = vadd.f32 %v274, %v438
  %v471 = vadd.f32 %v275, %v439
  %v472 = vadd.f32 %v276, %v440
  %v473 = vadd.f32 %v277, %v441
  %v474 = vadd.f32 %v278, %v442
  %v475 = vadd.f32 %v279, %v443
  %v476 = vadd.f32 %v280, %v444
  %v477 = vadd.f32 %v281, %v445
  %v478 = vadd.f32 %v282, %v446
  %v479 = vadd.f32 %v283, %v447
  %v480 = vadd.f32 %v284, %v448
  %v481 = vadd.f32 %v285, %v449
  %v482 = vadd.f32 %v286, %v450
  %v483 = vadd.f32 %v287, %v451
  %v484 = vadd.f32 %v288, %v452
  %485 = vset.pattern.permute.xlu0 2
  %486 = vperm.xlu0 %485, %v21
  %v487 = vpop.permute.xlu0 %486
  %489 = vset.pattern.permute.xlu0 2
  %490 = vperm.xlu0 %489, %v22
  %v491 = vpop.permute.xlu0 %490
  %493 = vset.pattern.permute.xlu0 2
  %494 = vperm.xlu0 %493, %v23
  %v495 = vpop.permute.xlu0 %494
  %497 = vset.pattern.permute.xlu0 2
  %498 = vperm.xlu0 %497, %v24
  %v499 = vpop.permute.xlu0 %498
  %501 = vset.pattern.permute.xlu0 2
  %502 = vperm.xlu0 %501, %v25
  %v503 = vpop.permute.xlu0 %502
  %505 = vset.pattern.permute.xlu0 2
  %506 = vperm.xlu0 %505, %v26
  %v507 = vpop.permute.xlu0 %506
  %509 = vset.pattern.permute.xlu0 2
  %510 = vperm.xlu0 %509, %v27
  %v511 = vpop.permute.xlu0 %510
  %513 = vset.pattern.permute.xlu0 2
  %514 = vperm.xlu0 %513, %v28
  %v515 = vpop.permute.xlu0 %514
  %517 = vset.pattern.permute.xlu0 2
  %518 = vperm.xlu0 %517, %v29
  %v519 = vpop.permute.xlu0 %518
  %521 = vset.pattern.permute.xlu0 2
  %522 = vperm.xlu0 %521, %v30
  %v523 = vpop.permute.xlu0 %522
  %525 = vset.pattern.permute.xlu0 2
  %526 = vperm.xlu0 %525, %v31
  %v527 = vpop.permute.xlu0 %526
  %529 = vset.pattern.permute.xlu0 2
  %530 = vperm.xlu0 %529, %v32
  %v531 = vpop.permute.xlu0 %530
  %533 = vset.pattern.permute.xlu0 2
  %534 = vperm.xlu0 %533, %v33
  %v535 = vpop.permute.xlu0 %534
  %537 = vset.pattern.permute.xlu0 2
  %538 = vperm.xlu0 %537, %v34
  %v539 = vpop.permute.xlu0 %538
  %541 = vset.pattern.permute.xlu0 2
  %542 = vperm.xlu0 %541, %v35
  %v543 = vpop.permute.xlu0 %542
  %545 = vset.pattern.permute.xlu0 2
  %546 = vperm.xlu0 %545, %v36
  %v547 = vpop.permute.xlu0 %546
  %549 = vset.pattern.permute.xlu0 2
  %550 = vperm.xlu0 %549, %v37
  %v551 = vpop.permute.xlu0 %550
  %553 = vset.pattern.permute.xlu0 2
  %554 = vperm.xlu0 %553, %v38
  %v555 = vpop.permute.xlu0 %554
  %557 = vset.pattern.permute.xlu0 2
  %558 = vperm.xlu0 %557, %v39
  %v559 = vpop.permute.xlu0 %558
  %561 = vset.pattern.permute.xlu0 2
  %562 = vperm.xlu0 %561, %v40
  %v563 = vpop.permute.xlu0 %562
  %565 = vset.pattern.permute.xlu0 2
  %566 = vperm.xlu0 %565, %v41
  %v567 = vpop.permute.xlu0 %566
  %569 = vset.pattern.permute.xlu0 2
  %570 = vperm.xlu0 %569, %v42
  %v571 = vpop.permute.xlu0 %570
  %573 = vset.pattern.permute.xlu0 2
  %574 = vperm.xlu0 %573, %v43
  %v575 = vpop.permute.xlu0 %574
  %577 = vset.pattern.permute.xlu0 2
  %578 = vperm.xlu0 %577, %v44
  %v579 = vpop.permute.xlu0 %578
  %581 = vset.pattern.permute.xlu0 2
  %582 = vperm.xlu0 %581, %v45
  %v583 = vpop.permute.xlu0 %582
  %585 = vset.pattern.permute.xlu0 2
  %586 = vperm.xlu0 %585, %v46
  %v587 = vpop.permute.xlu0 %586
  %589 = vset.pattern.permute.xlu0 2
  %590 = vperm.xlu0 %589, %v47
  %v591 = vpop.permute.xlu0 %590
  %593 = vset.pattern.permute.xlu0 2
  %594 = vperm.xlu0 %593, %v48
  %v595 = vpop.permute.xlu0 %594
  %597 = vset.pattern.permute.xlu0 2
  %598 = vperm.xlu0 %597, %v49
  %v599 = vpop.permute.xlu0 %598
  %601 = vset.pattern.permute.xlu0 2
  %602 = vperm.xlu0 %601, %v50
  %v603 = vpop.permute.xlu0 %602
  %605 = vset.pattern.permute.xlu0 2
  %606 = vperm.xlu0 %605, %v51
  %v607 = vpop.permute.xlu0 %606
  %609 = vset.pattern.permute.xlu0 2
  %610 = vperm.xlu0 %609, %v52
  %v611 = vpop.permute.xlu0 %610
  %v613 = vlaneseq
  %v614 = vshrl.u32 %v613, 7
  %v615 = vsub.s32 2, %v614
  %v616 = vrot.slane %v53, %v615
  %v617 = vmul.f32 %v487, %v616
  %v618 = vmul.f32 %v491, %v616
  %v619 = vmul.f32 %v495, %v616
  %v620 = vmul.f32 %v499, %v616
  %v621 = vmul.f32 %v503, %v616
  %v622 = vmul.f32 %v507, %v616
  %v623 = vmul.f32 %v511, %v616
  %v624 = vmul.f32 %v515, %v616
  %v625 = vmul.f32 %v519, %v616
  %v626 = vmul.f32 %v523, %v616
  %v627 = vmul.f32 %v527, %v616
  %v628 = vmul.f32 %v531, %v616
  %v629 = vmul.f32 %v535, %v616
  %v630 = vmul.f32 %v539, %v616
  %v631 = vmul.f32 %v543, %v616
  %v632 = vmul.f32 %v547, %v616
  %v633 = vmul.f32 %v551, %v616
  %v634 = vmul.f32 %v555, %v616
  %v635 = vmul.f32 %v559, %v616
  %v636 = vmul.f32 %v563, %v616
  %v637 = vmul.f32 %v567, %v616
  %v638 = vmul.f32 %v571, %v616
  %v639 = vmul.f32 %v575, %v616
  %v640 = vmul.f32 %v579, %v616
  %v641 = vmul.f32 %v583, %v616
  %v642 = vmul.f32 %v587, %v616
  %v643 = vmul.f32 %v591, %v616
  %v644 = vmul.f32 %v595, %v616
  %v645 = vmul.f32 %v599, %v616
  %v646 = vmul.f32 %v603, %v616
  %v647 = vmul.f32 %v607, %v616
  %v648 = vmul.f32 %v611, %v616
  %v649 = vadd.f32 %v453, %v617
  %v650 = vadd.f32 %v454, %v618
  %v651 = vadd.f32 %v455, %v619
  %v652 = vadd.f32 %v456, %v620
  %v653 = vadd.f32 %v457, %v621
  %v654 = vadd.f32 %v458, %v622
  %v655 = vadd.f32 %v459, %v623
  %v656 = vadd.f32 %v460, %v624
  %v657 = vadd.f32 %v461, %v625
  %v658 = vadd.f32 %v462, %v626
  %v659 = vadd.f32 %v463, %v627
  %v660 = vadd.f32 %v464, %v628
  %v661 = vadd.f32 %v465, %v629
  %v662 = vadd.f32 %v466, %v630
  %v663 = vadd.f32 %v467, %v631
  %v664 = vadd.f32 %v468, %v632
  %v665 = vadd.f32 %v469, %v633
  %v666 = vadd.f32 %v470, %v634
  %v667 = vadd.f32 %v471, %v635
  %v668 = vadd.f32 %v472, %v636
  %v669 = vadd.f32 %v473, %v637
  %v670 = vadd.f32 %v474, %v638
  %v671 = vadd.f32 %v475, %v639
  %v672 = vadd.f32 %v476, %v640
  %v673 = vadd.f32 %v477, %v641
  %v674 = vadd.f32 %v478, %v642
  %v675 = vadd.f32 %v479, %v643
  %v676 = vadd.f32 %v480, %v644
  %v677 = vadd.f32 %v481, %v645
  %v678 = vadd.f32 %v482, %v646
  %v679 = vadd.f32 %v483, %v647
  %v680 = vadd.f32 %v484, %v648
  %681 = vset.pattern.permute.xlu0 3
  %682 = vperm.xlu0 %681, %v21
  %v683 = vpop.permute.xlu0 %682
  %685 = vset.pattern.permute.xlu0 3
  %686 = vperm.xlu0 %685, %v22
  %v687 = vpop.permute.xlu0 %686
  %689 = vset.pattern.permute.xlu0 3
  %690 = vperm.xlu0 %689, %v23
  %v691 = vpop.permute.xlu0 %690
  %693 = vset.pattern.permute.xlu0 3
  %694 = vperm.xlu0 %693, %v24
  %v695 = vpop.permute.xlu0 %694
  %697 = vset.pattern.permute.xlu0 3
  %698 = vperm.xlu0 %697, %v25
  %v699 = vpop.permute.xlu0 %698
  %701 = vset.pattern.permute.xlu0 3
  %702 = vperm.xlu0 %701, %v26
  %v703 = vpop.permute.xlu0 %702
  %705 = vset.pattern.permute.xlu0 3
  %706 = vperm.xlu0 %705, %v27
  %v707 = vpop.permute.xlu0 %706
  %709 = vset.pattern.permute.xlu0 3
  %710 = vperm.xlu0 %709, %v28
  %v711 = vpop.permute.xlu0 %710
  %713 = vset.pattern.permute.xlu0 3
  %714 = vperm.xlu0 %713, %v29
  %v715 = vpop.permute.xlu0 %714
  %717 = vset.pattern.permute.xlu0 3
  %718 = vperm.xlu0 %717, %v30
  %v719 = vpop.permute.xlu0 %718
  %721 = vset.pattern.permute.xlu0 3
  %722 = vperm.xlu0 %721, %v31
  %v723 = vpop.permute.xlu0 %722
  %725 = vset.pattern.permute.xlu0 3
  %726 = vperm.xlu0 %725, %v32
  %v727 = vpop.permute.xlu0 %726
  %729 = vset.pattern.permute.xlu0 3
  %730 = vperm.xlu0 %729, %v33
  %v731 = vpop.permute.xlu0 %730
  %733 = vset.pattern.permute.xlu0 3
  %734 = vperm.xlu0 %733, %v34
  %v735 = vpop.permute.xlu0 %734
  %737 = vset.pattern.permute.xlu0 3
  %738 = vperm.xlu0 %737, %v35
  %v739 = vpop.permute.xlu0 %738
  %741 = vset.pattern.permute.xlu0 3
  %742 = vperm.xlu0 %741, %v36
  %v743 = vpop.permute.xlu0 %742
  %745 = vset.pattern.permute.xlu0 3
  %746 = vperm.xlu0 %745, %v37
  %v747 = vpop.permute.xlu0 %746
  %749 = vset.pattern.permute.xlu0 3
  %750 = vperm.xlu0 %749, %v38
  %v751 = vpop.permute.xlu0 %750
  %753 = vset.pattern.permute.xlu0 3
  %754 = vperm.xlu0 %753, %v39
  %v755 = vpop.permute.xlu0 %754
  %757 = vset.pattern.permute.xlu0 3
  %758 = vperm.xlu0 %757, %v40
  %v759 = vpop.permute.xlu0 %758
  %761 = vset.pattern.permute.xlu0 3
  %762 = vperm.xlu0 %761, %v41
  %v763 = vpop.permute.xlu0 %762
  %765 = vset.pattern.permute.xlu0 3
  %766 = vperm.xlu0 %765, %v42
  %v767 = vpop.permute.xlu0 %766
  %769 = vset.pattern.permute.xlu0 3
  %770 = vperm.xlu0 %769, %v43
  %v771 = vpop.permute.xlu0 %770
  %773 = vset.pattern.permute.xlu0 3
  %774 = vperm.xlu0 %773, %v44
  %v775 = vpop.permute.xlu0 %774
  %777 = vset.pattern.permute.xlu0 3
  %778 = vperm.xlu0 %777, %v45
  %v779 = vpop.permute.xlu0 %778
  %781 = vset.pattern.permute.xlu0 3
  %782 = vperm.xlu0 %781, %v46
  %v783 = vpop.permute.xlu0 %782
  %785 = vset.pattern.permute.xlu0 3
  %786 = vperm.xlu0 %785, %v47
  %v787 = vpop.permute.xlu0 %786
  %789 = vset.pattern.permute.xlu0 3
  %790 = vperm.xlu0 %789, %v48
  %v791 = vpop.permute.xlu0 %790
  %793 = vset.pattern.permute.xlu0 3
  %794 = vperm.xlu0 %793, %v49
  %v795 = vpop.permute.xlu0 %794
  %797 = vset.pattern.permute.xlu0 3
  %798 = vperm.xlu0 %797, %v50
  %v799 = vpop.permute.xlu0 %798
  %801 = vset.pattern.permute.xlu0 3
  %802 = vperm.xlu0 %801, %v51
  %v803 = vpop.permute.xlu0 %802
  %805 = vset.pattern.permute.xlu0 3
  %806 = vperm.xlu0 %805, %v52
  %v807 = vpop.permute.xlu0 %806
  %v809 = vlaneseq
  %v810 = vshrl.u32 %v809, 7
  %v811 = vsub.s32 3, %v810
  %v812 = vrot.slane %v53, %v811
  %v813 = vmul.f32 %v683, %v812
  %v814 = vmul.f32 %v687, %v812
  %v815 = vmul.f32 %v691, %v812
  %v816 = vmul.f32 %v695, %v812
  %v817 = vmul.f32 %v699, %v812
  %v818 = vmul.f32 %v703, %v812
  %v819 = vmul.f32 %v707, %v812
  %v820 = vmul.f32 %v711, %v812
  %v821 = vmul.f32 %v715, %v812
  %v822 = vmul.f32 %v719, %v812
  %v823 = vmul.f32 %v723, %v812
  %v824 = vmul.f32 %v727, %v812
  %v825 = vmul.f32 %v731, %v812
  %v826 = vmul.f32 %v735, %v812
  %v827 = vmul.f32 %v739, %v812
  %v828 = vmul.f32 %v743, %v812
  %v829 = vmul.f32 %v747, %v812
  %v830 = vmul.f32 %v751, %v812
  %v831 = vmul.f32 %v755, %v812
  %v832 = vmul.f32 %v759, %v812
  %v833 = vmul.f32 %v763, %v812
  %v834 = vmul.f32 %v767, %v812
  %v835 = vmul.f32 %v771, %v812
  %v836 = vmul.f32 %v775, %v812
  %v837 = vmul.f32 %v779, %v812
  %v838 = vmul.f32 %v783, %v812
  %v839 = vmul.f32 %v787, %v812
  %v840 = vmul.f32 %v791, %v812
  %v841 = vmul.f32 %v795, %v812
  %v842 = vmul.f32 %v799, %v812
  %v843 = vmul.f32 %v803, %v812
  %v844 = vmul.f32 %v807, %v812
  %v845 = vadd.f32 %v649, %v813
  %v846 = vadd.f32 %v650, %v814
  %v847 = vadd.f32 %v651, %v815
  %v848 = vadd.f32 %v652, %v816
  %v849 = vadd.f32 %v653, %v817
  %v850 = vadd.f32 %v654, %v818
  %v851 = vadd.f32 %v655, %v819
  %v852 = vadd.f32 %v656, %v820
  %v853 = vadd.f32 %v657, %v821
  %v854 = vadd.f32 %v658, %v822
  %v855 = vadd.f32 %v659, %v823
  %v856 = vadd.f32 %v660, %v824
  %v857 = vadd.f32 %v661, %v825
  %v858 = vadd.f32 %v662, %v826
  %v859 = vadd.f32 %v663, %v827
  %v860 = vadd.f32 %v664, %v828
  %v861 = vadd.f32 %v665, %v829
  %v862 = vadd.f32 %v666, %v830
  %v863 = vadd.f32 %v667, %v831
  %v864 = vadd.f32 %v668, %v832
  %v865 = vadd.f32 %v669, %v833
  %v866 = vadd.f32 %v670, %v834
  %v867 = vadd.f32 %v671, %v835
  %v868 = vadd.f32 %v672, %v836
  %v869 = vadd.f32 %v673, %v837
  %v870 = vadd.f32 %v674, %v838
  %v871 = vadd.f32 %v675, %v839
  %v872 = vadd.f32 %v676, %v840
  %v873 = vadd.f32 %v677, %v841
  %v874 = vadd.f32 %v678, %v842
  %v875 = vadd.f32 %v679, %v843
  %v876 = vadd.f32 %v680, %v844
  %v877 = vmax.f32 %v845, 0.0
  %v878 = vmax.f32 %v846, 0.0
  %v879 = vmax.f32 %v847, 0.0
  %v880 = vmax.f32 %v848, 0.0
  %v881 = vmax.f32 %v849, 0.0
  %v882 = vmax.f32 %v850, 0.0
  %v883 = vmax.f32 %v851, 0.0
  %v884 = vmax.f32 %v852, 0.0
  %v885 = vmax.f32 %v853, 0.0
  %v886 = vmax.f32 %v854, 0.0
  %v887 = vmax.f32 %v855, 0.0
  %v888 = vmax.f32 %v856, 0.0
  %v889 = vmax.f32 %v857, 0.0
  %v890 = vmax.f32 %v858, 0.0
  %v891 = vmax.f32 %v859, 0.0
  %v892 = vmax.f32 %v860, 0.0
  %v893 = vmax.f32 %v861, 0.0
  %v894 = vmax.f32 %v862, 0.0
  %v895 = vmax.f32 %v863, 0.0
  %v896 = vmax.f32 %v864, 0.0
  %v897 = vmax.f32 %v865, 0.0
  %v898 = vmax.f32 %v866, 0.0
  %v899 = vmax.f32 %v867, 0.0
  %v900 = vmax.f32 %v868, 0.0
  %v901 = vmax.f32 %v869, 0.0
  %v902 = vmax.f32 %v870, 0.0
  %v903 = vmax.f32 %v871, 0.0
  %v904 = vmax.f32 %v872, 0.0
  %v905 = vmax.f32 %v873, 0.0
  %v906 = vmax.f32 %v874, 0.0
  %v907 = vmax.f32 %v875, 0.0
  %v908 = vmax.f32 %v876, 0.0
  %v909 = vpack.c.bf16 %v878, %v877
  %v910 = vpack.c.bf16 %v880, %v879
  %v911 = vpack.c.bf16 %v882, %v881
  %v912 = vpack.c.bf16 %v884, %v883
  %v913 = vpack.c.bf16 %v886, %v885
  %v914 = vpack.c.bf16 %v888, %v887
  %v915 = vpack.c.bf16 %v890, %v889
  %v916 = vpack.c.bf16 %v892, %v891
  %v917 = vpack.c.bf16 %v894, %v893
  %v918 = vpack.c.bf16 %v896, %v895
  %v919 = vpack.c.bf16 %v898, %v897
  %v920 = vpack.c.bf16 %v900, %v899
  %v921 = vpack.c.bf16 %v902, %v901
  %v922 = vpack.c.bf16 %v904, %v903
  %v923 = vpack.c.bf16 %v906, %v905
  %v924 = vpack.c.bf16 %v908, %v907
  %v925 = vld [vmem:[%s3] sm:$0xf]
  %v926 = vld [vmem:[%s3 + $0x4] sm:$0xf]
  %v927 = vld [vmem:[%s3 + $0x8] sm:$0xf]
  %v928 = vld [vmem:[%s3 + $0xc] sm:$0xf]
  %v929 = vld [vmem:[%s3 + $0x10] sm:$0xf]
  %v930 = vld [vmem:[%s3 + $0x14] sm:$0xf]
  %v931 = vld [vmem:[%s3 + $0x18] sm:$0xf]
  %v932 = vld [vmem:[%s3 + $0x1c] sm:$0xf]
  %v933 = vld [vmem:[%s3 + $0x20] sm:$0xf]
  %v934 = vld [vmem:[%s3 + $0x24] sm:$0xf]
  %v935 = vld [vmem:[%s3 + $0x28] sm:$0xf]
  %v936 = vld [vmem:[%s3 + $0x2c] sm:$0xf]
  %v937 = vld [vmem:[%s3 + $0x30] sm:$0xf]
  %v938 = vld [vmem:[%s3 + $0x34] sm:$0xf]
  %v939 = vld [vmem:[%s3 + $0x38] sm:$0xf]
  %v940 = vld [vmem:[%s3 + $0x3c] sm:$0xf]
  %v941 = vld [vmem:[%s4] sm:$0x1]
  %v943 = vlaneseq
  %v944 = vshrl.u32 %v943, 7
  %v945 = vsub.s32 0, %v944
  %v946 = vrot.slane %v941, %v945
  %v964 = vunpack.c.l.b16 %v925
  %v965 = vunpack.c.l.b16 %v926
  %v966 = vunpack.c.l.b16 %v927
  %v967 = vunpack.c.l.b16 %v928
  %v968 = vunpack.c.l.b16 %v929
  %v969 = vunpack.c.l.b16 %v930
  %v970 = vunpack.c.l.b16 %v931
  %v971 = vunpack.c.l.b16 %v932
  %v972 = vunpack.c.l.b16 %v933
  %v973 = vunpack.c.l.b16 %v934
  %v974 = vunpack.c.l.b16 %v935
  %v975 = vunpack.c.l.b16 %v936
  %v976 = vunpack.c.l.b16 %v937
  %v977 = vunpack.c.l.b16 %v938
  %v978 = vunpack.c.l.b16 %v939
  %v979 = vunpack.c.l.b16 %v940
  %v980 = vpack.c.b16 %v965, %v964
  %v981 = vpack.c.b16 %v967, %v966
  %v982 = vpack.c.b16 %v969, %v968
  %v983 = vpack.c.b16 %v971, %v970
  %v984 = vpack.c.b16 %v973, %v972
  %v985 = vpack.c.b16 %v975, %v974
  %v986 = vpack.c.b16 %v977, %v976
  %v987 = vpack.c.b16 %v979, %v978
  %996 = vmatprep.subr.bf16.mxu0 0
  %997 = vmatpush1.bf16.msra.mxu0 %v987
  %998 = vmatprep.subr.bf16.mxu0 0
  %999 = vmatpush1.bf16.msra.mxu0 %v986
  %1000 = vmatprep.subr.bf16.mxu0 0
  %1001 = vmatpush1.bf16.msra.mxu0 %v985
  %1002 = vmatprep.subr.bf16.mxu0 0
  %1003 = vmatpush1.bf16.msra.mxu0 %v984
  %1004 = vmatprep.subr.bf16.mxu0 0
  %1005 = vmatpush1.bf16.msra.mxu0 %v983
  %1006 = vmatprep.subr.bf16.mxu0 0
  %1007 = vmatpush1.bf16.msra.mxu0 %v982
  %1008 = vmatprep.subr.bf16.mxu0 0
  %1009 = vmatpush1.bf16.msra.mxu0 %v981
  %1010 = vmatprep.subr.bf16.mxu0 0
  %1011 = vmatpush1.bf16.msra.mxu0 %v980
  %1012 = vmatprep.subr.bf16.mxu0 0
  %1013 = vmatpush2.bf16.msra.mxu0 0
  %1014 = vmatprep.subr.bf16.mxu0 0
  %1015 = vmatpush2.bf16.msra.mxu0 0
  %1016 = vmatprep.subr.bf16.mxu0 0
  %1017 = vmatpush2.bf16.msra.mxu0 0
  %1018 = vmatprep.subr.bf16.mxu0 0
  %1019 = vmatpush2.bf16.msra.mxu0 0
  %1020 = vmatprep.subr.bf16.mxu0 0
  %1021 = vmatpush2.bf16.msra.mxu0 0
  %1022 = vmatprep.subr.bf16.mxu0 0
  %1023 = vmatpush2.bf16.msra.mxu0 0
  %1024 = vmatprep.subr.bf16.mxu0 0
  %1025 = vmatpush2.bf16.msra.mxu0 0
  %1026 = vmatprep.subr.bf16.mxu0 0
  %1027 = vmatpush2.bf16.msra.mxu0 0
  %1028 = vmatprep.mubr.bf16.mxu0 0
  %1029 = vmatmul.mubr.bf16.gmra.mxu0 %v909
  %v1030 = vpop.f32.mrf.mxu0
  %v1031 = vadd.f32 %v946, %v1030
  %v1032 = vpop.f32.mrf.mxu0
  %v1033 = vpop.f32.mrf.mxu0
  %v1034 = vadd.f32 %v946, %v1033
  %v1035 = vpop.f32.mrf.mxu0
  %1036 = vmatprep.mubr.bf16.mxu0 0
  %1037 = vmatmul.mubr.bf16.gmra.mxu0 %v910
  %v1038 = vpop.f32.mrf.mxu0
  %v1039 = vadd.f32 %v946, %v1038
  %v1040 = vpop.f32.mrf.mxu0
  %v1041 = vpop.f32.mrf.mxu0
  %v1042 = vadd.f32 %v946, %v1041
  %v1043 = vpop.f32.mrf.mxu0
  %1044 = vmatprep.mubr.bf16.mxu0 0
  %1045 = vmatmul.mubr.bf16.gmra.mxu0 %v911
  %v1046 = vpop.f32.mrf.mxu0
  %v1047 = vadd.f32 %v946, %v1046
  %v1048 = vpop.f32.mrf.mxu0
  %v1049 = vpop.f32.mrf.mxu0
  %v1050 = vadd.f32 %v946, %v1049
  %v1051 = vpop.f32.mrf.mxu0
  %1052 = vmatprep.mubr.bf16.mxu0 0
  %1053 = vmatmul.mubr.bf16.gmra.mxu0 %v912
  %v1054 = vpop.f32.mrf.mxu0
  %v1055 = vadd.f32 %v946, %v1054
  %v1056 = vpop.f32.mrf.mxu0
  %v1057 = vpop.f32.mrf.mxu0
  %v1058 = vadd.f32 %v946, %v1057
  %v1059 = vpop.f32.mrf.mxu0
  %1060 = vmatprep.mubr.bf16.mxu0 0
  %1061 = vmatmul.mubr.bf16.gmra.mxu0 %v913
  %v1062 = vpop.f32.mrf.mxu0
  %v1063 = vadd.f32 %v946, %v1062
  %v1064 = vpop.f32.mrf.mxu0
  %v1065 = vpop.f32.mrf.mxu0
  %v1066 = vadd.f32 %v946, %v1065
  %v1067 = vpop.f32.mrf.mxu0
  %1068 = vmatprep.mubr.bf16.mxu0 0
  %1069 = vmatmul.mubr.bf16.gmra.mxu0 %v914
  %v1070 = vpop.f32.mrf.mxu0
  %v1071 = vadd.f32 %v946, %v1070
  %v1072 = vpop.f32.mrf.mxu0
  %v1073 = vpop.f32.mrf.mxu0
  %v1074 = vadd.f32 %v946, %v1073
  %v1075 = vpop.f32.mrf.mxu0
  %1076 = vmatprep.mubr.bf16.mxu0 0
  %1077 = vmatmul.mubr.bf16.gmra.mxu0 %v915
  %v1078 = vpop.f32.mrf.mxu0
  %v1079 = vadd.f32 %v946, %v1078
  %v1080 = vpop.f32.mrf.mxu0
  %v1081 = vpop.f32.mrf.mxu0
  %v1082 = vadd.f32 %v946, %v1081
  %v1083 = vpop.f32.mrf.mxu0
  %1084 = vmatprep.mubr.bf16.mxu0 0
  %1085 = vmatmul.mubr.bf16.gmra.mxu0 %v916
  %v1086 = vpop.f32.mrf.mxu0
  %v1087 = vadd.f32 %v946, %v1086
  %v1088 = vpop.f32.mrf.mxu0
  %v1089 = vpop.f32.mrf.mxu0
  %v1090 = vadd.f32 %v946, %v1089
  %v1091 = vpop.f32.mrf.mxu0
  %1092 = vmatprep.mubr.bf16.mxu0 0
  %1093 = vmatmul.mubr.bf16.gmra.mxu0 %v917
  %v1094 = vpop.f32.mrf.mxu0
  %v1095 = vadd.f32 %v946, %v1094
  %v1096 = vpop.f32.mrf.mxu0
  %v1097 = vpop.f32.mrf.mxu0
  %v1098 = vadd.f32 %v946, %v1097
  %v1099 = vpop.f32.mrf.mxu0
  %1100 = vmatprep.mubr.bf16.mxu0 0
  %1101 = vmatmul.mubr.bf16.gmra.mxu0 %v918
  %v1102 = vpop.f32.mrf.mxu0
  %v1103 = vadd.f32 %v946, %v1102
  %v1104 = vpop.f32.mrf.mxu0
  %v1105 = vpop.f32.mrf.mxu0
  %v1106 = vadd.f32 %v946, %v1105
  %v1107 = vpop.f32.mrf.mxu0
  %1108 = vmatprep.mubr.bf16.mxu0 0
  %1109 = vmatmul.mubr.bf16.gmra.mxu0 %v919
  %v1110 = vpop.f32.mrf.mxu0
  %v1111 = vadd.f32 %v946, %v1110
  %v1112 = vpop.f32.mrf.mxu0
  %v1113 = vpop.f32.mrf.mxu0
  %v1114 = vadd.f32 %v946, %v1113
  %v1115 = vpop.f32.mrf.mxu0
  %1116 = vmatprep.mubr.bf16.mxu0 0
  %1117 = vmatmul.mubr.bf16.gmra.mxu0 %v920
  %v1118 = vpop.f32.mrf.mxu0
  %v1119 = vadd.f32 %v946, %v1118
  %v1120 = vpop.f32.mrf.mxu0
  %v1121 = vpop.f32.mrf.mxu0
  %v1122 = vadd.f32 %v946, %v1121
  %v1123 = vpop.f32.mrf.mxu0
  %1124 = vmatprep.mubr.bf16.mxu0 0
  %1125 = vmatmul.mubr.bf16.gmra.mxu0 %v921
  %v1126 = vpop.f32.mrf.mxu0
  %v1127 = vadd.f32 %v946, %v1126
  %v1128 = vpop.f32.mrf.mxu0
  %v1129 = vpop.f32.mrf.mxu0
  %v1130 = vadd.f32 %v946, %v1129
  %v1131 = vpop.f32.mrf.mxu0
  %1132 = vmatprep.mubr.bf16.mxu0 0
  %1133 = vmatmul.mubr.bf16.gmra.mxu0 %v922
  %v1134 = vpop.f32.mrf.mxu0
  %v1135 = vadd.f32 %v946, %v1134
  %v1136 = vpop.f32.mrf.mxu0
  %v1137 = vpop.f32.mrf.mxu0
  %v1138 = vadd.f32 %v946, %v1137
  %v1139 = vpop.f32.mrf.mxu0
  %1140 = vmatprep.mubr.bf16.mxu0 0
  %1141 = vmatmul.mubr.bf16.gmra.mxu0 %v923
  %v1142 = vpop.f32.mrf.mxu0
  %v1143 = vadd.f32 %v946, %v1142
  %v1144 = vpop.f32.mrf.mxu0
  %v1145 = vpop.f32.mrf.mxu0
  %v1146 = vadd.f32 %v946, %v1145
  %v1147 = vpop.f32.mrf.mxu0
  %1148 = vmatprep.mubr.bf16.mxu0 0
  %1149 = vmatmul.mubr.bf16.gmra.mxu0 %v924
  %v1150 = vpop.f32.mrf.mxu0
  %v1151 = vadd.f32 %v946, %v1150
  %v1152 = vpop.f32.mrf.mxu0
  %v1153 = vpop.f32.mrf.mxu0
  %v1154 = vadd.f32 %v946, %v1153
  %v1155 = vpop.f32.mrf.mxu0
  %1156 = vdwg.mxu0
  %v1157 = vmax.f32 %v1031, 0.0
  %v1158 = vmax.f32 %v1034, 0.0
  %v1159 = vmax.f32 %v1039, 0.0
  %v1160 = vmax.f32 %v1042, 0.0
  %v1161 = vmax.f32 %v1047, 0.0
  %v1162 = vmax.f32 %v1050, 0.0
  %v1163 = vmax.f32 %v1055, 0.0
  %v1164 = vmax.f32 %v1058, 0.0
  %v1165 = vmax.f32 %v1063, 0.0
  %v1166 = vmax.f32 %v1066, 0.0
  %v1167 = vmax.f32 %v1071, 0.0
  %v1168 = vmax.f32 %v1074, 0.0
  %v1169 = vmax.f32 %v1079, 0.0
  %v1170 = vmax.f32 %v1082, 0.0
  %v1171 = vmax.f32 %v1087, 0.0
  %v1172 = vmax.f32 %v1090, 0.0
  %v1173 = vmax.f32 %v1095, 0.0
  %v1174 = vmax.f32 %v1098, 0.0
  %v1175 = vmax.f32 %v1103, 0.0
  %v1176 = vmax.f32 %v1106, 0.0
  %v1177 = vmax.f32 %v1111, 0.0
  %v1178 = vmax.f32 %v1114, 0.0
  %v1179 = vmax.f32 %v1119, 0.0
  %v1180 = vmax.f32 %v1122, 0.0
  %v1181 = vmax.f32 %v1127, 0.0
  %v1182 = vmax.f32 %v1130, 0.0
  %v1183 = vmax.f32 %v1135, 0.0
  %v1184 = vmax.f32 %v1138, 0.0
  %v1185 = vmax.f32 %v1143, 0.0
  %v1186 = vmax.f32 %v1146, 0.0
  %v1187 = vmax.f32 %v1151, 0.0
  %v1188 = vmax.f32 %v1154, 0.0
  %v1189 = vpack.c.bf16 %v1158, %v1157
  %v1190 = vpack.c.bf16 %v1160, %v1159
  %v1191 = vpack.c.bf16 %v1162, %v1161
  %v1192 = vpack.c.bf16 %v1164, %v1163
  %v1193 = vpack.c.bf16 %v1166, %v1165
  %v1194 = vpack.c.bf16 %v1168, %v1167
  %v1195 = vpack.c.bf16 %v1170, %v1169
  %v1196 = vpack.c.bf16 %v1172, %v1171
  %v1197 = vpack.c.bf16 %v1174, %v1173
  %v1198 = vpack.c.bf16 %v1176, %v1175
  %v1199 = vpack.c.bf16 %v1178, %v1177
  %v1200 = vpack.c.bf16 %v1180, %v1179
  %v1201 = vpack.c.bf16 %v1182, %v1181
  %v1202 = vpack.c.bf16 %v1184, %v1183
  %v1203 = vpack.c.bf16 %v1186, %v1185
  %v1204 = vpack.c.bf16 %v1188, %v1187
  %s1205 = scalar_lea.vmem %s3, 64
  %v1206 = vld [vmem:[%s1205] sm:$0xf]
  %v1207 = vld [vmem:[%s1205 + $0x4] sm:$0xf]
  %v1208 = vld [vmem:[%s1205 + $0x8] sm:$0xf]
  %v1209 = vld [vmem:[%s1205 + $0xc] sm:$0xf]
  %v1210 = vld [vmem:[%s1205 + $0x10] sm:$0xf]
  %v1211 = vld [vmem:[%s1205 + $0x14] sm:$0xf]
  %v1212 = vld [vmem:[%s1205 + $0x18] sm:$0xf]
  %v1213 = vld [vmem:[%s1205 + $0x1c] sm:$0xf]
  %v1214 = vld [vmem:[%s1205 + $0x20] sm:$0xf]
  %v1215 = vld [vmem:[%s1205 + $0x24] sm:$0xf]
  %v1216 = vld [vmem:[%s1205 + $0x28] sm:$0xf]
  %v1217 = vld [vmem:[%s1205 + $0x2c] sm:$0xf]
  %v1218 = vld [vmem:[%s1205 + $0x30] sm:$0xf]
  %v1219 = vld [vmem:[%s1205 + $0x34] sm:$0xf]
  %v1220 = vld [vmem:[%s1205 + $0x38] sm:$0xf]
  %v1221 = vld [vmem:[%s1205 + $0x3c] sm:$0xf]
  %s1222 = scalar_lea.vmem %s4, 1
  %v1223 = vld [vmem:[%s1222] sm:$0x1]
  %v1225 = vlaneseq
  %v1226 = vshrl.u32 %v1225, 7
  %v1227 = vsub.s32 0, %v1226
  %v1228 = vrot.slane %v1223, %v1227
  %v1246 = vunpack.c.l.b16 %v1206
  %v1247 = vunpack.c.l.b16 %v1207
  %v1248 = vunpack.c.l.b16 %v1208
  %v1249 = vunpack.c.l.b16 %v1209
  %v1250 = vunpack.c.l.b16 %v1210
  %v1251 = vunpack.c.l.b16 %v1211
  %v1252 = vunpack.c.l.b16 %v1212
  %v1253 = vunpack.c.l.b16 %v1213
  %v1254 = vunpack.c.l.b16 %v1214
  %v1255 = vunpack.c.l.b16 %v1215
  %v1256 = vunpack.c.l.b16 %v1216
  %v1257 = vunpack.c.l.b16 %v1217
  %v1258 = vunpack.c.l.b16 %v1218
  %v1259 = vunpack.c.l.b16 %v1219
  %v1260 = vunpack.c.l.b16 %v1220
  %v1261 = vunpack.c.l.b16 %v1221
  %v1262 = vpack.c.b16 %v1247, %v1246
  %v1263 = vpack.c.b16 %v1249, %v1248
  %v1264 = vpack.c.b16 %v1251, %v1250
  %v1265 = vpack.c.b16 %v1253, %v1252
  %v1266 = vpack.c.b16 %v1255, %v1254
  %v1267 = vpack.c.b16 %v1257, %v1256
  %v1268 = vpack.c.b16 %v1259, %v1258
  %v1269 = vpack.c.b16 %v1261, %v1260
  %1278 = vmatprep.subr.bf16.mxu0 0
  %1279 = vmatpush1.bf16.msra.mxu0 %v1269
  %1280 = vmatprep.subr.bf16.mxu0 0
  %1281 = vmatpush1.bf16.msra.mxu0 %v1268
  %1282 = vmatprep.subr.bf16.mxu0 0
  %1283 = vmatpush1.bf16.msra.mxu0 %v1267
  %1284 = vmatprep.subr.bf16.mxu0 0
  %1285 = vmatpush1.bf16.msra.mxu0 %v1266
  %1286 = vmatprep.subr.bf16.mxu0 0
  %1287 = vmatpush1.bf16.msra.mxu0 %v1265
  %1288 = vmatprep.subr.bf16.mxu0 0
  %1289 = vmatpush1.bf16.msra.mxu0 %v1264
  %1290 = vmatprep.subr.bf16.mxu0 0
  %1291 = vmatpush1.bf16.msra.mxu0 %v1263
  %1292 = vmatprep.subr.bf16.mxu0 0
  %1293 = vmatpush1.bf16.msra.mxu0 %v1262
  %1294 = vmatprep.subr.bf16.mxu0 0
  %1295 = vmatpush2.bf16.msra.mxu0 0
  %1296 = vmatprep.subr.bf16.mxu0 0
  %1297 = vmatpush2.bf16.msra.mxu0 0
  %1298 = vmatprep.subr.bf16.mxu0 0
  %1299 = vmatpush2.bf16.msra.mxu0 0
  %1300 = vmatprep.subr.bf16.mxu0 0
  %1301 = vmatpush2.bf16.msra.mxu0 0
  %1302 = vmatprep.subr.bf16.mxu0 0
  %1303 = vmatpush2.bf16.msra.mxu0 0
  %1304 = vmatprep.subr.bf16.mxu0 0
  %1305 = vmatpush2.bf16.msra.mxu0 0
  %1306 = vmatprep.subr.bf16.mxu0 0
  %1307 = vmatpush2.bf16.msra.mxu0 0
  %1308 = vmatprep.subr.bf16.mxu0 0
  %1309 = vmatpush2.bf16.msra.mxu0 0
  %1310 = vmatprep.mubr.bf16.mxu0 0
  %1311 = vmatmul.mubr.bf16.gmra.mxu0 %v1189
  %v1312 = vpop.f32.mrf.mxu0
  %v1313 = vadd.f32 %v1228, %v1312
  %v1314 = vpop.f32.mrf.mxu0
  %v1315 = vpop.f32.mrf.mxu0
  %v1316 = vadd.f32 %v1228, %v1315
  %v1317 = vpop.f32.mrf.mxu0
  %1318 = vmatprep.mubr.bf16.mxu0 0
  %1319 = vmatmul.mubr.bf16.gmra.mxu0 %v1190
  %v1320 = vpop.f32.mrf.mxu0
  %v1321 = vadd.f32 %v1228, %v1320
  %v1322 = vpop.f32.mrf.mxu0
  %v1323 = vpop.f32.mrf.mxu0
  %v1324 = vadd.f32 %v1228, %v1323
  %v1325 = vpop.f32.mrf.mxu0
  %1326 = vmatprep.mubr.bf16.mxu0 0
  %1327 = vmatmul.mubr.bf16.gmra.mxu0 %v1191
  %v1328 = vpop.f32.mrf.mxu0
  %v1329 = vadd.f32 %v1228, %v1328
  %v1330 = vpop.f32.mrf.mxu0
  %v1331 = vpop.f32.mrf.mxu0
  %v1332 = vadd.f32 %v1228, %v1331
  %v1333 = vpop.f32.mrf.mxu0
  %1334 = vmatprep.mubr.bf16.mxu0 0
  %1335 = vmatmul.mubr.bf16.gmra.mxu0 %v1192
  %v1336 = vpop.f32.mrf.mxu0
  %v1337 = vadd.f32 %v1228, %v1336
  %v1338 = vpop.f32.mrf.mxu0
  %v1339 = vpop.f32.mrf.mxu0
  %v1340 = vadd.f32 %v1228, %v1339
  %v1341 = vpop.f32.mrf.mxu0
  %1342 = vmatprep.mubr.bf16.mxu0 0
  %1343 = vmatmul.mubr.bf16.gmra.mxu0 %v1193
  %v1344 = vpop.f32.mrf.mxu0
  %v1345 = vadd.f32 %v1228, %v1344
  %v1346 = vpop.f32.mrf.mxu0
  %v1347 = vpop.f32.mrf.mxu0
  %v1348 = vadd.f32 %v1228, %v1347
  %v1349 = vpop.f32.mrf.mxu0
  %1350 = vmatprep.mubr.bf16.mxu0 0
  %1351 = vmatmul.mubr.bf16.gmra.mxu0 %v1194
  %v1352 = vpop.f32.mrf.mxu0
  %v1353 = vadd.f32 %v1228, %v1352
  %v1354 = vpop.f32.mrf.mxu0
  %v1355 = vpop.f32.mrf.mxu0
  %v1356 = vadd.f32 %v1228, %v1355
  %v1357 = vpop.f32.mrf.mxu0
  %1358 = vmatprep.mubr.bf16.mxu0 0
  %1359 = vmatmul.mubr.bf16.gmra.mxu0 %v1195
  %v1360 = vpop.f32.mrf.mxu0
  %v1361 = vadd.f32 %v1228, %v1360
  %v1362 = vpop.f32.mrf.mxu0
  %v1363 = vpop.f32.mrf.mxu0
  %v1364 = vadd.f32 %v1228, %v1363
  %v1365 = vpop.f32.mrf.mxu0
  %1366 = vmatprep.mubr.bf16.mxu0 0
  %1367 = vmatmul.mubr.bf16.gmra.mxu0 %v1196
  %v1368 = vpop.f32.mrf.mxu0
  %v1369 = vadd.f32 %v1228, %v1368
  %v1370 = vpop.f32.mrf.mxu0
  %v1371 = vpop.f32.mrf.mxu0
  %v1372 = vadd.f32 %v1228, %v1371
  %v1373 = vpop.f32.mrf.mxu0
  %1374 = vmatprep.mubr.bf16.mxu0 0
  %1375 = vmatmul.mubr.bf16.gmra.mxu0 %v1197
  %v1376 = vpop.f32.mrf.mxu0
  %v1377 = vadd.f32 %v1228, %v1376
  %v1378 = vpop.f32.mrf.mxu0
  %v1379 = vpop.f32.mrf.mxu0
  %v1380 = vadd.f32 %v1228, %v1379
  %v1381 = vpop.f32.mrf.mxu0
  %1382 = vmatprep.mubr.bf16.mxu0 0
  %1383 = vmatmul.mubr.bf16.gmra.mxu0 %v1198
  %v1384 = vpop.f32.mrf.mxu0
  %v1385 = vadd.f32 %v1228, %v1384
  %v1386 = vpop.f32.mrf.mxu0
  %v1387 = vpop.f32.mrf.mxu0
  %v1388 = vadd.f32 %v1228, %v1387
  %v1389 = vpop.f32.mrf.mxu0
  %1390 = vmatprep.mubr.bf16.mxu0 0
  %1391 = vmatmul.mubr.bf16.gmra.mxu0 %v1199
  %v1392 = vpop.f32.mrf.mxu0
  %v1393 = vadd.f32 %v1228, %v1392
  %v1394 = vpop.f32.mrf.mxu0
  %v1395 = vpop.f32.mrf.mxu0
  %v1396 = vadd.f32 %v1228, %v1395
  %v1397 = vpop.f32.mrf.mxu0
  %1398 = vmatprep.mubr.bf16.mxu0 0
  %1399 = vmatmul.mubr.bf16.gmra.mxu0 %v1200
  %v1400 = vpop.f32.mrf.mxu0
  %v1401 = vadd.f32 %v1228, %v1400
  %v1402 = vpop.f32.mrf.mxu0
  %v1403 = vpop.f32.mrf.mxu0
  %v1404 = vadd.f32 %v1228, %v1403
  %v1405 = vpop.f32.mrf.mxu0
  %1406 = vmatprep.mubr.bf16.mxu0 0
  %1407 = vmatmul.mubr.bf16.gmra.mxu0 %v1201
  %v1408 = vpop.f32.mrf.mxu0
  %v1409 = vadd.f32 %v1228, %v1408
  %v1410 = vpop.f32.mrf.mxu0
  %v1411 = vpop.f32.mrf.mxu0
  %v1412 = vadd.f32 %v1228, %v1411
  %v1413 = vpop.f32.mrf.mxu0
  %1414 = vmatprep.mubr.bf16.mxu0 0
  %1415 = vmatmul.mubr.bf16.gmra.mxu0 %v1202
  %v1416 = vpop.f32.mrf.mxu0
  %v1417 = vadd.f32 %v1228, %v1416
  %v1418 = vpop.f32.mrf.mxu0
  %v1419 = vpop.f32.mrf.mxu0
  %v1420 = vadd.f32 %v1228, %v1419
  %v1421 = vpop.f32.mrf.mxu0
  %1422 = vmatprep.mubr.bf16.mxu0 0
  %1423 = vmatmul.mubr.bf16.gmra.mxu0 %v1203
  %v1424 = vpop.f32.mrf.mxu0
  %v1425 = vadd.f32 %v1228, %v1424
  %v1426 = vpop.f32.mrf.mxu0
  %v1427 = vpop.f32.mrf.mxu0
  %v1428 = vadd.f32 %v1228, %v1427
  %v1429 = vpop.f32.mrf.mxu0
  %1430 = vmatprep.mubr.bf16.mxu0 0
  %1431 = vmatmul.mubr.bf16.gmra.mxu0 %v1204
  %v1432 = vpop.f32.mrf.mxu0
  %v1433 = vadd.f32 %v1228, %v1432
  %v1434 = vpop.f32.mrf.mxu0
  %v1435 = vpop.f32.mrf.mxu0
  %v1436 = vadd.f32 %v1228, %v1435
  %v1437 = vpop.f32.mrf.mxu0
  %1438 = vdwg.mxu0
  %v1439 = vmax.f32 %v1313, 0.0
  %v1440 = vmax.f32 %v1316, 0.0
  %v1441 = vmax.f32 %v1321, 0.0
  %v1442 = vmax.f32 %v1324, 0.0
  %v1443 = vmax.f32 %v1329, 0.0
  %v1444 = vmax.f32 %v1332, 0.0
  %v1445 = vmax.f32 %v1337, 0.0
  %v1446 = vmax.f32 %v1340, 0.0
  %v1447 = vmax.f32 %v1345, 0.0
  %v1448 = vmax.f32 %v1348, 0.0
  %v1449 = vmax.f32 %v1353, 0.0
  %v1450 = vmax.f32 %v1356, 0.0
  %v1451 = vmax.f32 %v1361, 0.0
  %v1452 = vmax.f32 %v1364, 0.0
  %v1453 = vmax.f32 %v1369, 0.0
  %v1454 = vmax.f32 %v1372, 0.0
  %v1455 = vmax.f32 %v1377, 0.0
  %v1456 = vmax.f32 %v1380, 0.0
  %v1457 = vmax.f32 %v1385, 0.0
  %v1458 = vmax.f32 %v1388, 0.0
  %v1459 = vmax.f32 %v1393, 0.0
  %v1460 = vmax.f32 %v1396, 0.0
  %v1461 = vmax.f32 %v1401, 0.0
  %v1462 = vmax.f32 %v1404, 0.0
  %v1463 = vmax.f32 %v1409, 0.0
  %v1464 = vmax.f32 %v1412, 0.0
  %v1465 = vmax.f32 %v1417, 0.0
  %v1466 = vmax.f32 %v1420, 0.0
  %v1467 = vmax.f32 %v1425, 0.0
  %v1468 = vmax.f32 %v1428, 0.0
  %v1469 = vmax.f32 %v1433, 0.0
  %v1470 = vmax.f32 %v1436, 0.0
  %v1471 = vpack.c.bf16 %v1440, %v1439
  %v1472 = vpack.c.bf16 %v1442, %v1441
  %v1473 = vpack.c.bf16 %v1444, %v1443
  %v1474 = vpack.c.bf16 %v1446, %v1445
  %v1475 = vpack.c.bf16 %v1448, %v1447
  %v1476 = vpack.c.bf16 %v1450, %v1449
  %v1477 = vpack.c.bf16 %v1452, %v1451
  %v1478 = vpack.c.bf16 %v1454, %v1453
  %v1479 = vpack.c.bf16 %v1456, %v1455
  %v1480 = vpack.c.bf16 %v1458, %v1457
  %v1481 = vpack.c.bf16 %v1460, %v1459
  %v1482 = vpack.c.bf16 %v1462, %v1461
  %v1483 = vpack.c.bf16 %v1464, %v1463
  %v1484 = vpack.c.bf16 %v1466, %v1465
  %v1485 = vpack.c.bf16 %v1468, %v1467
  %v1486 = vpack.c.bf16 %v1470, %v1469
  %s1487 = scalar_lea.vmem %s3, 128
  %v1488 = vld [vmem:[%s1487] sm:$0xf]
  %v1489 = vld [vmem:[%s1487 + $0x4] sm:$0xf]
  %v1490 = vld [vmem:[%s1487 + $0x8] sm:$0xf]
  %v1491 = vld [vmem:[%s1487 + $0xc] sm:$0xf]
  %v1492 = vld [vmem:[%s1487 + $0x10] sm:$0xf]
  %v1493 = vld [vmem:[%s1487 + $0x14] sm:$0xf]
  %v1494 = vld [vmem:[%s1487 + $0x18] sm:$0xf]
  %v1495 = vld [vmem:[%s1487 + $0x1c] sm:$0xf]
  %v1496 = vld [vmem:[%s1487 + $0x20] sm:$0xf]
  %v1497 = vld [vmem:[%s1487 + $0x24] sm:$0xf]
  %v1498 = vld [vmem:[%s1487 + $0x28] sm:$0xf]
  %v1499 = vld [vmem:[%s1487 + $0x2c] sm:$0xf]
  %v1500 = vld [vmem:[%s1487 + $0x30] sm:$0xf]
  %v1501 = vld [vmem:[%s1487 + $0x34] sm:$0xf]
  %v1502 = vld [vmem:[%s1487 + $0x38] sm:$0xf]
  %v1503 = vld [vmem:[%s1487 + $0x3c] sm:$0xf]
  %s1504 = scalar_lea.vmem %s4, 2
  %v1505 = vld [vmem:[%s1504] sm:$0x1]
  %v1507 = vlaneseq
  %v1508 = vshrl.u32 %v1507, 7
  %v1509 = vsub.s32 0, %v1508
  %v1510 = vrot.slane %v1505, %v1509
  %v1528 = vunpack.c.l.b16 %v1488
  %v1529 = vunpack.c.l.b16 %v1489
  %v1530 = vunpack.c.l.b16 %v1490
  %v1531 = vunpack.c.l.b16 %v1491
  %v1532 = vunpack.c.l.b16 %v1492
  %v1533 = vunpack.c.l.b16 %v1493
  %v1534 = vunpack.c.l.b16 %v1494
  %v1535 = vunpack.c.l.b16 %v1495
  %v1536 = vunpack.c.l.b16 %v1496
  %v1537 = vunpack.c.l.b16 %v1497
  %v1538 = vunpack.c.l.b16 %v1498
  %v1539 = vunpack.c.l.b16 %v1499
  %v1540 = vunpack.c.l.b16 %v1500
  %v1541 = vunpack.c.l.b16 %v1501
  %v1542 = vunpack.c.l.b16 %v1502
  %v1543 = vunpack.c.l.b16 %v1503
  %v1544 = vpack.c.b16 %v1529, %v1528
  %v1545 = vpack.c.b16 %v1531, %v1530
  %v1546 = vpack.c.b16 %v1533, %v1532
  %v1547 = vpack.c.b16 %v1535, %v1534
  %v1548 = vpack.c.b16 %v1537, %v1536
  %v1549 = vpack.c.b16 %v1539, %v1538
  %v1550 = vpack.c.b16 %v1541, %v1540
  %v1551 = vpack.c.b16 %v1543, %v1542
  %1560 = vmatprep.subr.bf16.mxu0 0
  %1561 = vmatpush1.bf16.msra.mxu0 %v1551
  %1562 = vmatprep.subr.bf16.mxu0 0
  %1563 = vmatpush1.bf16.msra.mxu0 %v1550
  %1564 = vmatprep.subr.bf16.mxu0 0
  %1565 = vmatpush1.bf16.msra.mxu0 %v1549
  %1566 = vmatprep.subr.bf16.mxu0 0
  %1567 = vmatpush1.bf16.msra.mxu0 %v1548
  %1568 = vmatprep.subr.bf16.mxu0 0
  %1569 = vmatpush1.bf16.msra.mxu0 %v1547
  %1570 = vmatprep.subr.bf16.mxu0 0
  %1571 = vmatpush1.bf16.msra.mxu0 %v1546
  %1572 = vmatprep.subr.bf16.mxu0 0
  %1573 = vmatpush1.bf16.msra.mxu0 %v1545
  %1574 = vmatprep.subr.bf16.mxu0 0
  %1575 = vmatpush1.bf16.msra.mxu0 %v1544
  %1576 = vmatprep.subr.bf16.mxu0 0
  %1577 = vmatpush2.bf16.msra.mxu0 0
  %1578 = vmatprep.subr.bf16.mxu0 0
  %1579 = vmatpush2.bf16.msra.mxu0 0
  %1580 = vmatprep.subr.bf16.mxu0 0
  %1581 = vmatpush2.bf16.msra.mxu0 0
  %1582 = vmatprep.subr.bf16.mxu0 0
  %1583 = vmatpush2.bf16.msra.mxu0 0
  %1584 = vmatprep.subr.bf16.mxu0 0
  %1585 = vmatpush2.bf16.msra.mxu0 0
  %1586 = vmatprep.subr.bf16.mxu0 0
  %1587 = vmatpush2.bf16.msra.mxu0 0
  %1588 = vmatprep.subr.bf16.mxu0 0
  %1589 = vmatpush2.bf16.msra.mxu0 0
  %1590 = vmatprep.subr.bf16.mxu0 0
  %1591 = vmatpush2.bf16.msra.mxu0 0
  %1592 = vmatprep.mubr.bf16.mxu0 0
  %1593 = vmatmul.mubr.bf16.gmra.mxu0 %v1471
  %v1594 = vpop.f32.mrf.mxu0
  %v1595 = vadd.f32 %v1510, %v1594
  %v1596 = vpop.f32.mrf.mxu0
  %v1597 = vpop.f32.mrf.mxu0
  %v1598 = vadd.f32 %v1510, %v1597
  %v1599 = vpop.f32.mrf.mxu0
  %1600 = vmatprep.mubr.bf16.mxu0 0
  %1601 = vmatmul.mubr.bf16.gmra.mxu0 %v1472
  %v1602 = vpop.f32.mrf.mxu0
  %v1603 = vadd.f32 %v1510, %v1602
  %v1604 = vpop.f32.mrf.mxu0
  %v1605 = vpop.f32.mrf.mxu0
  %v1606 = vadd.f32 %v1510, %v1605
  %v1607 = vpop.f32.mrf.mxu0
  %1608 = vmatprep.mubr.bf16.mxu0 0
  %1609 = vmatmul.mubr.bf16.gmra.mxu0 %v1473
  %v1610 = vpop.f32.mrf.mxu0
  %v1611 = vadd.f32 %v1510, %v1610
  %v1612 = vpop.f32.mrf.mxu0
  %v1613 = vpop.f32.mrf.mxu0
  %v1614 = vadd.f32 %v1510, %v1613
  %v1615 = vpop.f32.mrf.mxu0
  %1616 = vmatprep.mubr.bf16.mxu0 0
  %1617 = vmatmul.mubr.bf16.gmra.mxu0 %v1474
  %v1618 = vpop.f32.mrf.mxu0
  %v1619 = vadd.f32 %v1510, %v1618
  %v1620 = vpop.f32.mrf.mxu0
  %v1621 = vpop.f32.mrf.mxu0
  %v1622 = vadd.f32 %v1510, %v1621
  %v1623 = vpop.f32.mrf.mxu0
  %1624 = vmatprep.mubr.bf16.mxu0 0
  %1625 = vmatmul.mubr.bf16.gmra.mxu0 %v1475
  %v1626 = vpop.f32.mrf.mxu0
  %v1627 = vadd.f32 %v1510, %v1626
  %v1628 = vpop.f32.mrf.mxu0
  %v1629 = vpop.f32.mrf.mxu0
  %v1630 = vadd.f32 %v1510, %v1629
  %v1631 = vpop.f32.mrf.mxu0
  %1632 = vmatprep.mubr.bf16.mxu0 0
  %1633 = vmatmul.mubr.bf16.gmra.mxu0 %v1476
  %v1634 = vpop.f32.mrf.mxu0
  %v1635 = vadd.f32 %v1510, %v1634
  %v1636 = vpop.f32.mrf.mxu0
  %v1637 = vpop.f32.mrf.mxu0
  %v1638 = vadd.f32 %v1510, %v1637
  %v1639 = vpop.f32.mrf.mxu0
  %1640 = vmatprep.mubr.bf16.mxu0 0
  %1641 = vmatmul.mubr.bf16.gmra.mxu0 %v1477
  %v1642 = vpop.f32.mrf.mxu0
  %v1643 = vadd.f32 %v1510, %v1642
  %v1644 = vpop.f32.mrf.mxu0
  %v1645 = vpop.f32.mrf.mxu0
  %v1646 = vadd.f32 %v1510, %v1645
  %v1647 = vpop.f32.mrf.mxu0
  %1648 = vmatprep.mubr.bf16.mxu0 0
  %1649 = vmatmul.mubr.bf16.gmra.mxu0 %v1478
  %v1650 = vpop.f32.mrf.mxu0
  %v1651 = vadd.f32 %v1510, %v1650
  %v1652 = vpop.f32.mrf.mxu0
  %v1653 = vpop.f32.mrf.mxu0
  %v1654 = vadd.f32 %v1510, %v1653
  %v1655 = vpop.f32.mrf.mxu0
  %1656 = vmatprep.mubr.bf16.mxu0 0
  %1657 = vmatmul.mubr.bf16.gmra.mxu0 %v1479
  %v1658 = vpop.f32.mrf.mxu0
  %v1659 = vadd.f32 %v1510, %v1658
  %v1660 = vpop.f32.mrf.mxu0
  %v1661 = vpop.f32.mrf.mxu0
  %v1662 = vadd.f32 %v1510, %v1661
  %v1663 = vpop.f32.mrf.mxu0
  %1664 = vmatprep.mubr.bf16.mxu0 0
  %1665 = vmatmul.mubr.bf16.gmra.mxu0 %v1480
  %v1666 = vpop.f32.mrf.mxu0
  %v1667 = vadd.f32 %v1510, %v1666
  %v1668 = vpop.f32.mrf.mxu0
  %v1669 = vpop.f32.mrf.mxu0
  %v1670 = vadd.f32 %v1510, %v1669
  %v1671 = vpop.f32.mrf.mxu0
  %1672 = vmatprep.mubr.bf16.mxu0 0
  %1673 = vmatmul.mubr.bf16.gmra.mxu0 %v1481
  %v1674 = vpop.f32.mrf.mxu0
  %v1675 = vadd.f32 %v1510, %v1674
  %v1676 = vpop.f32.mrf.mxu0
  %v1677 = vpop.f32.mrf.mxu0
  %v1678 = vadd.f32 %v1510, %v1677
  %v1679 = vpop.f32.mrf.mxu0
  %1680 = vmatprep.mubr.bf16.mxu0 0
  %1681 = vmatmul.mubr.bf16.gmra.mxu0 %v1482
  %v1682 = vpop.f32.mrf.mxu0
  %v1683 = vadd.f32 %v1510, %v1682
  %v1684 = vpop.f32.mrf.mxu0
  %v1685 = vpop.f32.mrf.mxu0
  %v1686 = vadd.f32 %v1510, %v1685
  %v1687 = vpop.f32.mrf.mxu0
  %1688 = vmatprep.mubr.bf16.mxu0 0
  %1689 = vmatmul.mubr.bf16.gmra.mxu0 %v1483
  %v1690 = vpop.f32.mrf.mxu0
  %v1691 = vadd.f32 %v1510, %v1690
  %v1692 = vpop.f32.mrf.mxu0
  %v1693 = vpop.f32.mrf.mxu0
  %v1694 = vadd.f32 %v1510, %v1693
  %v1695 = vpop.f32.mrf.mxu0
  %1696 = vmatprep.mubr.bf16.mxu0 0
  %1697 = vmatmul.mubr.bf16.gmra.mxu0 %v1484
  %v1698 = vpop.f32.mrf.mxu0
  %v1699 = vadd.f32 %v1510, %v1698
  %v1700 = vpop.f32.mrf.mxu0
  %v1701 = vpop.f32.mrf.mxu0
  %v1702 = vadd.f32 %v1510, %v1701
  %v1703 = vpop.f32.mrf.mxu0
  %1704 = vmatprep.mubr.bf16.mxu0 0
  %1705 = vmatmul.mubr.bf16.gmra.mxu0 %v1485
  %v1706 = vpop.f32.mrf.mxu0
  %v1707 = vadd.f32 %v1510, %v1706
  %v1708 = vpop.f32.mrf.mxu0
  %v1709 = vpop.f32.mrf.mxu0
  %v1710 = vadd.f32 %v1510, %v1709
  %v1711 = vpop.f32.mrf.mxu0
  %1712 = vmatprep.mubr.bf16.mxu0 0
  %1713 = vmatmul.mubr.bf16.gmra.mxu0 %v1486
  %v1714 = vpop.f32.mrf.mxu0
  %v1715 = vadd.f32 %v1510, %v1714
  %v1716 = vpop.f32.mrf.mxu0
  %v1717 = vpop.f32.mrf.mxu0
  %v1718 = vadd.f32 %v1510, %v1717
  %v1719 = vpop.f32.mrf.mxu0
  %1720 = vdwg.mxu0
  %v1721 = vpack.c.bf16 %v1598, %v1595
  %v1722 = vpack.c.bf16 %v1606, %v1603
  %v1723 = vpack.c.bf16 %v1614, %v1611
  %v1724 = vpack.c.bf16 %v1622, %v1619
  %v1725 = vpack.c.bf16 %v1630, %v1627
  %v1726 = vpack.c.bf16 %v1638, %v1635
  %v1727 = vpack.c.bf16 %v1646, %v1643
  %v1728 = vpack.c.bf16 %v1654, %v1651
  %v1729 = vpack.c.bf16 %v1662, %v1659
  %v1730 = vpack.c.bf16 %v1670, %v1667
  %v1731 = vpack.c.bf16 %v1678, %v1675
  %v1732 = vpack.c.bf16 %v1686, %v1683
  %v1733 = vpack.c.bf16 %v1694, %v1691
  %v1734 = vpack.c.bf16 %v1702, %v1699
  %v1735 = vpack.c.bf16 %v1710, %v1707
  %v1736 = vpack.c.bf16 %v1718, %v1715
  %v1753 = vunpack.c.l.b16 %v1721
  %v1754 = vunpack.c.h.b16 %v1721
  %v1755 = vunpack.c.l.b16 %v1722
  %v1756 = vunpack.c.h.b16 %v1722
  %v1757 = vunpack.c.l.b16 %v1723
  %v1758 = vunpack.c.h.b16 %v1723
  %v1759 = vunpack.c.l.b16 %v1724
  %v1760 = vunpack.c.h.b16 %v1724
  %v1761 = vunpack.c.l.b16 %v1725
  %v1762 = vunpack.c.h.b16 %v1725
  %v1763 = vunpack.c.l.b16 %v1726
  %v1764 = vunpack.c.h.b16 %v1726
  %v1765 = vunpack.c.l.b16 %v1727
  %v1766 = vunpack.c.h.b16 %v1727
  %v1767 = vunpack.c.l.b16 %v1728
  %v1768 = vunpack.c.h.b16 %v1728
  %v1769 = vunpack.c.l.b16 %v1729
  %v1770 = vunpack.c.h.b16 %v1729
  %v1771 = vunpack.c.l.b16 %v1730
  %v1772 = vunpack.c.h.b16 %v1730
  %v1773 = vunpack.c.l.b16 %v1731
  %v1774 = vunpack.c.h.b16 %v1731
  %v1775 = vunpack.c.l.b16 %v1732
  %v1776 = vunpack.c.h.b16 %v1732
  %v1777 = vunpack.c.l.b16 %v1733
  %v1778 = vunpack.c.h.b16 %v1733
  %v1779 = vunpack.c.l.b16 %v1734
  %v1780 = vunpack.c.h.b16 %v1734
  %v1781 = vunpack.c.l.b16 %v1735
  %v1782 = vunpack.c.h.b16 %v1735
  %v1783 = vunpack.c.l.b16 %v1736
  %v1784 = vunpack.c.h.b16 %v1736
  %v1785 = vpack.c.b16 %v1753, %v1753
  %v1786 = vpack.c.b16 %v1754, %v1754
  %v1787 = vpack.c.b16 %v1755, %v1755
  %v1788 = vpack.c.b16 %v1756, %v1756
  %v1789 = vpack.c.b16 %v1757, %v1757
  %v1790 = vpack.c.b16 %v1758, %v1758
  %v1791 = vpack.c.b16 %v1759, %v1759
  %v1792 = vpack.c.b16 %v1760, %v1760
  %v1793 = vpack.c.b16 %v1761, %v1761
  %v1794 = vpack.c.b16 %v1762, %v1762
  %v1795 = vpack.c.b16 %v1763, %v1763
  %v1796 = vpack.c.b16 %v1764, %v1764
  %v1797 = vpack.c.b16 %v1765, %v1765
  %v1798 = vpack.c.b16 %v1766, %v1766
  %v1799 = vpack.c.b16 %v1767, %v1767
  %v1800 = vpack.c.b16 %v1768, %v1768
  %v1801 = vpack.c.b16 %v1769, %v1769
  %v1802 = vpack.c.b16 %v1770, %v1770
  %v1803 = vpack.c.b16 %v1771, %v1771
  %v1804 = vpack.c.b16 %v1772, %v1772
  %v1805 = vpack.c.b16 %v1773, %v1773
  %v1806 = vpack.c.b16 %v1774, %v1774
  %v1807 = vpack.c.b16 %v1775, %v1775
  %v1808 = vpack.c.b16 %v1776, %v1776
  %v1809 = vpack.c.b16 %v1777, %v1777
  %v1810 = vpack.c.b16 %v1778, %v1778
  %v1811 = vpack.c.b16 %v1779, %v1779
  %v1812 = vpack.c.b16 %v1780, %v1780
  %v1813 = vpack.c.b16 %v1781, %v1781
  %v1814 = vpack.c.b16 %v1782, %v1782
  %v1815 = vpack.c.b16 %v1783, %v1783
  %v1816 = vpack.c.b16 %v1784, %v1784
  %1849 = vst [vmem:[%s5] sm:$0xf] %v1785
  %1850 = vst [vmem:[%s5 + $0x4] sm:$0xf] %v1786
  %1851 = vst [vmem:[%s5 + $0x8] sm:$0xf] %v1787
  %1852 = vst [vmem:[%s5 + $0xc] sm:$0xf] %v1788
  %1853 = vst [vmem:[%s5 + $0x10] sm:$0xf] %v1789
  %1854 = vst [vmem:[%s5 + $0x14] sm:$0xf] %v1790
  %1855 = vst [vmem:[%s5 + $0x18] sm:$0xf] %v1791
  %1856 = vst [vmem:[%s5 + $0x1c] sm:$0xf] %v1792
  %1857 = vst [vmem:[%s5 + $0x20] sm:$0xf] %v1793
  %1858 = vst [vmem:[%s5 + $0x24] sm:$0xf] %v1794
  %1859 = vst [vmem:[%s5 + $0x28] sm:$0xf] %v1795
  %1860 = vst [vmem:[%s5 + $0x2c] sm:$0xf] %v1796
  %1861 = vst [vmem:[%s5 + $0x30] sm:$0xf] %v1797
  %1862 = vst [vmem:[%s5 + $0x34] sm:$0xf] %v1798
  %1863 = vst [vmem:[%s5 + $0x38] sm:$0xf] %v1799
  %1864 = vst [vmem:[%s5 + $0x3c] sm:$0xf] %v1800
  %1865 = vst [vmem:[%s5 + $0x40] sm:$0xf] %v1801
  %1866 = vst [vmem:[%s5 + $0x44] sm:$0xf] %v1802
  %1867 = vst [vmem:[%s5 + $0x48] sm:$0xf] %v1803
  %1868 = vst [vmem:[%s5 + $0x4c] sm:$0xf] %v1804
  %1869 = vst [vmem:[%s5 + $0x50] sm:$0xf] %v1805
  %1870 = vst [vmem:[%s5 + $0x54] sm:$0xf] %v1806
  %1871 = vst [vmem:[%s5 + $0x58] sm:$0xf] %v1807
  %1872 = vst [vmem:[%s5 + $0x5c] sm:$0xf] %v1808
  %1873 = vst [vmem:[%s5 + $0x60] sm:$0xf] %v1809
  %1874 = vst [vmem:[%s5 + $0x64] sm:$0xf] %v1810
  %1875 = vst [vmem:[%s5 + $0x68] sm:$0xf] %v1811
  %1876 = vst [vmem:[%s5 + $0x6c] sm:$0xf] %v1812
  %1877 = vst [vmem:[%s5 + $0x70] sm:$0xf] %v1813
  %1878 = vst [vmem:[%s5 + $0x74] sm:$0xf] %v1814
  %1879 = vst [vmem:[%s5 + $0x78] sm:$0xf] %v1815
  %1880 = vst [vmem:[%s5 + $0x7c] sm:$0xf] %v1816
  // Predicated region
  $region22: #{dqn_cartpole_forward.1} parent=0 // pred_check
    _
  $region23: #{dqn_cartpole_forward.1} parent=0 // pred_check_branch
    %1882 = sbr.rel (0) target = $region25
  $region24: #{dqn_cartpole_forward.1} parent=0 // pred_region
    _
  $region25: #{dqn_cartpole_forward.1} parent=0 // pred_fallthru
    _
  // Predicated region
  $region26: #{dqn_cartpole_forward.1} parent=0 // pred_check
    _
  $region27: #{dqn_cartpole_forward.1} parent=0 // pred_check_branch
    %1884 = sbr.rel (0) target = $region29
  $region28: #{dqn_cartpole_forward.1} parent=0 // pred_region
    _
  $region29: #{dqn_cartpole_forward.1} parent=0 // pred_fallthru
    _

</llo_original>
